<compile_context>
chip_gen: v5e
topology: v5e:2x2
jax: 0.10.0
libtpu: 0.0.40
codegen_flags: <defaults>
</compile_context>

<pallas_src>
import functools

import jax
import jax.numpy as jnp
from jax.experimental import pallas as pl
from jax.experimental.pallas import tpu as pltpu


# ----------------------------- Pallas kernel --------------------------------

def _lstm_head_kernel(x_ref,                       # (T*Bt, D)  this batch tile
                      wih0_ref, b0_ref, whh0_ref,  # layer-0 params
                      w1_ref, b1_ref,              # layer-1 fused [[Wih];[Whh]]
                      wout_ref, bout_ref,          # head, lane-padded to 128
                      out_ref,                     # (Bt, 128)
                      *, hidden_dim, seq_len, batch_tile):
    H, T, Bt = hidden_dim, seq_len, batch_tile

    # Hoisted layer-0 input projection for ALL timesteps: one MXU matmul
    # (M = T*Bt) instead of T tiny M=Bt matmuls inside the recurrence.
    xg = (jnp.dot(x_ref[...], wih0_ref[...],
                  preferred_element_type=jnp.float32) + b0_ref[...])

    whh0 = whh0_ref[...]
    w1 = w1_ref[...]
    b1 = b1_ref[...]

    def gate_nl(g):
        # PyTorch gate order: i, f, g, o
        i = jax.nn.sigmoid(g[:, 0 * H:1 * H])
        f = jax.nn.sigmoid(g[:, 1 * H:2 * H])
        c_hat = jnp.tanh(g[:, 2 * H:3 * H])
        o = jax.nn.sigmoid(g[:, 3 * H:4 * H])
        return i, f, c_hat, o

    h1 = jnp.zeros((Bt, H), jnp.float32)
    c1 = jnp.zeros((Bt, H), jnp.float32)
    h2 = jnp.zeros((Bt, H), jnp.float32)
    c2 = jnp.zeros((Bt, H), jnp.float32)

    # Statically unrolled recurrence (T is a small trace-time constant), so
    # every slice below has a static, sublane-tile-aligned start.
    for t in range(T):
        # ---- layer 0: input projection precomputed, only h @ W_hh here ----
        g0 = xg[t * Bt:(t + 1) * Bt, :] + jnp.dot(
            h1, whh0, preferred_element_type=jnp.float32)
        i0, f0, gc0, o0 = gate_nl(g0)
        c1 = f0 * c1 + i0 * gc0
        h1 = o0 * jnp.tanh(c1)

        # ---- layer 1: fused [input, hidden] @ [[W_ih]; [W_hh]] -------------
        g1 = jnp.dot(jnp.concatenate([h1, h2], axis=1), w1,
                     preferred_element_type=jnp.float32) + b1
        i1, f1, gc1, o1 = gate_nl(g1)
        c2 = f1 * c2 + i1 * gc1
        h2 = o1 * jnp.tanh(c2)

    # Head: (Bt, H) @ (H, 128); column 0 carries the real Linear(H, 1) output,
    # remaining columns are zero padding (lane-dense store).
    out_ref[...] = (jnp.dot(h2, wout_ref[...],
                            preferred_element_type=jnp.float32)
                    + bout_ref[...])


def price_predictor_lstm(x, params, *, batch_tile=8):
    """x: (B, T, D) float32 (batch_first, like PyTorch).  Returns (B,) f32."""
    B, T, D = x.shape
    H = params["whh0"].shape[0]
    assert B % batch_tile == 0, "batch must be a multiple of the batch tile"
    Bt = batch_tile
    nbt = B // Bt

    # (B, T, D) -> (n_tiles, T*Bt, D): each batch tile carries its timesteps
    # stacked time-major so the kernel's per-step slice is sublane-aligned.
    x_r = (x.reshape(nbt, Bt, T, D)
            .transpose(0, 2, 1, 3)
            .reshape(nbt, T * Bt, D))

    # Fused layer-1 weight [[W_ih1]; [W_hh1]] : (2H, 4H)
    w1 = jnp.concatenate([params["wih1"], params["whh1"]], axis=0)
    # Lane-pad the (H, 1) head to (H, 128) so the output store is lane-dense.
    wout_p = jnp.zeros((H, 128), jnp.float32).at[:, :1].set(params["wout"])
    bout_p = jnp.zeros((1, 128), jnp.float32).at[:, :1].set(params["bout"])

    # Weights are small & constant across grid steps: keep them whole in VMEM
    # (no block pipelining / no double buffering).
    vmem = pl.BlockSpec(memory_space=pltpu.MemorySpace.VMEM)

    out = pl.pallas_call(
        functools.partial(_lstm_head_kernel, hidden_dim=H, seq_len=T,
                          batch_tile=Bt),
        out_shape=jax.ShapeDtypeStruct((B, 128), jnp.float32),
        grid_spec=pltpu.PrefetchScalarGridSpec(
            num_scalar_prefetch=0,
            grid=(nbt,),                       # batch tiles: independent
            in_specs=[
                pl.BlockSpec((pl.Squeezed(), T * Bt, D),
                             lambda b: (b, 0, 0)),   # x for this batch tile
                vmem,   # wih0 (D, 4H)
                vmem,   # b0   (1, 4H)
                vmem,   # whh0 (H, 4H)
                vmem,   # w1   (2H, 4H)
                vmem,   # b1   (1, 4H)
                vmem,   # wout padded (H, 128)
                vmem,   # bout padded (1, 128)
            ],
            out_specs=pl.BlockSpec((Bt, 128), lambda b: (b, 0)),
        ),
        compiler_params=pltpu.CompilerParams(
            dimension_semantics=("parallel",)),   # batch axis -> megacore/2xTC
    )(x_r, params["wih0"], params["b0"], params["whh0"], w1, params["b1"],
      wout_p, bout_p)

    return out[:, 0]  # .squeeze() -> (B,)


# ------------------------- deterministic param init -------------------------

def init_params(key, input_dim, hidden_dim):
    """Uniform(-1/sqrt(H), 1/sqrt(H)) like PyTorch LSTM/Linear defaults."""
    H = hidden_dim
    bound = 1.0 / jnp.sqrt(jnp.float32(H))
    keys = jax.random.split(key, 12)
    u = lambda k, shape: jax.random.uniform(
        k, shape, jnp.float32, minval=-bound, maxval=bound)
    return {
        # layer 0  (weights pre-transposed for right-multiply; gate order ifgo)
        "wih0": u(keys[0], (input_dim, 4 * H)),
        "whh0": u(keys[1], (H, 4 * H)),
        "b0":   u(keys[2], (1, 4 * H)) + u(keys[3], (1, 4 * H)),  # b_ih + b_hh
        # layer 1
        "wih1": u(keys[4], (H, 4 * H)),
        "whh1": u(keys[5], (H, 4 * H)),
        "b1":   u(keys[6], (1, 4 * H)) + u(keys[7], (1, 4 * H)),
        # Linear(H, 1)
        "wout": u(keys[8], (H, 1)),
        "bout": u(keys[9], (1, 1)),
    }


# ----------------------------- pure-JAX reference ----------------------------

def reference(x, params):
    B, T, D = x.shape
    H = params["whh0"].shape[0]

    def cell(inp, h, c, wih, whh, b):
        g = inp @ wih + h @ whh + b
        i = jax.nn.sigmoid(g[:, 0 * H:1 * H])
        f = jax.nn.sigmoid(g[:, 1 * H:2 * H])
        gg = jnp.tanh(g[:, 2 * H:3 * H])
        o = jax.nn.sigmoid(g[:, 3 * H:4 * H])
        c = f * c + i * gg
        h = o * jnp.tanh(c)
        return h, c

    h1 = c1 = h2 = c2 = jnp.zeros((B, H), jnp.float32)
    for t in range(T):
        h1, c1 = cell(x[:, t, :], h1, c1,
                      params["wih0"], params["whh0"], params["b0"])
        h2, c2 = cell(h1, h2, c2,
                      params["wih1"], params["whh1"], params["b1"])
    return (h2 @ params["wout"] + params["bout"])[:, 0]


# ----------------------------------- main ------------------------------------

if __name__ == "__main__":
    # batch=16 (two sublane-aligned batch tiles of 8), seq=8, input_dim=8,
    # hidden_dim=32 (4H = 128 -> gate block spans exactly one lane tile).
    B, T, D, H = 16, 8, 8, 32

    key = jax.random.PRNGKey(0)
    kx, kp = jax.random.split(key)
    x = jax.random.normal(kx, (B, T, D), jnp.float32)
    params = init_params(kp, D, H)

    out = price_predictor_lstm(x, params)
    out = jax.block_until_ready(out)

    ref = reference(x, params)
    assert out.shape == (B,)
    assert jnp.allclose(out, ref, atol=1e-5, rtol=1e-5), (out, ref)

    print("KERNEL_OK")
</pallas_src>

<mosaic_0001>
module attributes {stable_mosaic.version = 11 : i64} {
  func.func @_lstm_head_kernel(%arg0: i32, %arg1: memref<1x64x8xf32, #tpu.memory_space<vmem>>, %arg2: memref<8x128xf32, #tpu.memory_space<vmem>>, %arg3: memref<1x128xf32, #tpu.memory_space<vmem>>, %arg4: memref<32x128xf32, #tpu.memory_space<vmem>>, %arg5: memref<64x128xf32, #tpu.memory_space<vmem>>, %arg6: memref<1x128xf32, #tpu.memory_space<vmem>>, %arg7: memref<32x128xf32, #tpu.memory_space<vmem>>, %arg8: memref<1x128xf32, #tpu.memory_space<vmem>>, %arg9: memref<8x128xf32, #tpu.memory_space<vmem>>) attributes {dimension_semantics = [#tpu.dimension_semantics<parallel>], iteration_bounds = array<i64: 2>, scalar_prefetch = 0 : i64, scratch_operands = 0 : i64, tpu.core_type = #tpu.core_type<tc>, window_params = [{transform_indices = @transform_0, window_bounds = array<i64: 1, 64, 8>}, {pipeline_mode = #tpu.pipeline_mode<synchronous>, transform_indices = @transform_1, window_bounds = array<i64: 8, 128>}, {pipeline_mode = #tpu.pipeline_mode<synchronous>, transform_indices = @transform_2, window_bounds = array<i64: 1, 128>}, {pipeline_mode = #tpu.pipeline_mode<synchronous>, transform_indices = @transform_3, window_bounds = array<i64: 32, 128>}, {pipeline_mode = #tpu.pipeline_mode<synchronous>, transform_indices = @transform_4, window_bounds = array<i64: 64, 128>}, {pipeline_mode = #tpu.pipeline_mode<synchronous>, transform_indices = @transform_5, window_bounds = array<i64: 1, 128>}, {pipeline_mode = #tpu.pipeline_mode<synchronous>, transform_indices = @transform_6, window_bounds = array<i64: 32, 128>}, {pipeline_mode = #tpu.pipeline_mode<synchronous>, transform_indices = @transform_7, window_bounds = array<i64: 1, 128>}, {transform_indices = @transform_8, window_bounds = array<i64: 8, 128>}]} {
    %c0 = arith.constant 0 : index
    %c0_0 = arith.constant 0 : index
    %c0_1 = arith.constant 0 : index
    %0 = vector.load %arg1[%c0, %c0_0, %c0_1] : memref<1x64x8xf32, #tpu.memory_space<vmem>>, vector<1x64x8xf32>
    %1 = vector.shape_cast %0 : vector<1x64x8xf32> to vector<64x8xf32>
    %c0_2 = arith.constant 0 : index
    %c0_3 = arith.constant 0 : index
    %2 = vector.load %arg2[%c0_2, %c0_3] : memref<8x128xf32, #tpu.memory_space<vmem>>, vector<8x128xf32>
    %cst = arith.constant dense<0.000000e+00> : vector<64x128xf32>
    %3 = tpu.matmul %1, %2, %cst {dimension_numbers = #tpu.dot_dimension_numbers<[1], [0], [0], [1], [0, 0, 1, 1], [], []>} : vector<64x8xf32>, vector<8x128xf32>, vector<64x128xf32> -> vector<64x128xf32>
    %c0_4 = arith.constant 0 : index
    %c0_5 = arith.constant 0 : index
    %4 = vector.load %arg3[%c0_4, %c0_5] : memref<1x128xf32, #tpu.memory_space<vmem>>, vector<1x128xf32>
    %5 = vector.broadcast %4 : vector<1x128xf32> to vector<64x128xf32>
    %6 = arith.addf %3, %5 : vector<64x128xf32>
    %c0_6 = arith.constant 0 : index
    %c0_7 = arith.constant 0 : index
    %7 = vector.load %arg4[%c0_6, %c0_7] : memref<32x128xf32, #tpu.memory_space<vmem>>, vector<32x128xf32>
    %c0_8 = arith.constant 0 : index
    %c0_9 = arith.constant 0 : index
    %8 = vector.load %arg5[%c0_8, %c0_9] : memref<64x128xf32, #tpu.memory_space<vmem>>, vector<64x128xf32>
    %c0_10 = arith.constant 0 : index
    %c0_11 = arith.constant 0 : index
    %9 = vector.load %arg6[%c0_10, %c0_11] : memref<1x128xf32, #tpu.memory_space<vmem>>, vector<1x128xf32>
    %cst_12 = arith.constant 0.000000e+00 : f32
    %10 = vector.broadcast %cst_12 : f32 to vector<8x32xf32>
    %cst_13 = arith.constant 0.000000e+00 : f32
    %11 = vector.broadcast %cst_13 : f32 to vector<8x32xf32>
    %cst_14 = arith.constant 0.000000e+00 : f32
    %12 = vector.broadcast %cst_14 : f32 to vector<8x32xf32>
    %cst_15 = arith.constant 0.000000e+00 : f32
    %13 = vector.broadcast %cst_15 : f32 to vector<8x32xf32>
    %14 = vector.extract_strided_slice %6 {offsets = [0, 0], sizes = [8, 128], strides = [1, 1]} : vector<64x128xf32> to vector<8x128xf32>
    %cst_16 = arith.constant dense<0.000000e+00> : vector<8x128xf32>
    %15 = tpu.matmul %10, %7, %cst_16 {dimension_numbers = #tpu.dot_dimension_numbers<[1], [0], [0], [1], [0, 0, 1, 1], [], []>} : vector<8x32xf32>, vector<32x128xf32>, vector<8x128xf32> -> vector<8x128xf32>
    %16 = arith.addf %14, %15 : vector<8x128xf32>
    %17 = vector.extract_strided_slice %16 {offsets = [0, 0], sizes = [8, 32], strides = [1, 1]} : vector<8x128xf32> to vector<8x32xf32>
    %18 = arith.negf %17 : vector<8x32xf32>
    %19 = math.exp %18 : vector<8x32xf32>
    %cst_17 = arith.constant 1.000000e+00 : f32
    %20 = vector.broadcast %cst_17 : f32 to vector<8x32xf32>
    %21 = arith.addf %20, %19 : vector<8x32xf32>
    %22 = arith.divf %20, %21 : vector<8x32xf32>
    %23 = vector.extract_strided_slice %16 {offsets = [0, 32], sizes = [8, 32], strides = [1, 1]} : vector<8x128xf32> to vector<8x32xf32>
    %24 = arith.negf %23 : vector<8x32xf32>
    %25 = math.exp %24 : vector<8x32xf32>
    %cst_18 = arith.constant 1.000000e+00 : f32
    %26 = vector.broadcast %cst_18 : f32 to vector<8x32xf32>
    %27 = arith.addf %26, %25 : vector<8x32xf32>
    %28 = arith.divf %26, %27 : vector<8x32xf32>
    %29 = vector.extract_strided_slice %16 {offsets = [0, 64], sizes = [8, 32], strides = [1, 1]} : vector<8x128xf32> to vector<8x32xf32>
    %30 = math.tanh %29 : vector<8x32xf32>
    %31 = vector.extract_strided_slice %16 {offsets = [0, 96], sizes = [8, 32], strides = [1, 1]} : vector<8x128xf32> to vector<8x32xf32>
    %32 = arith.negf %31 : vector<8x32xf32>
    %33 = math.exp %32 : vector<8x32xf32>
    %cst_19 = arith.constant 1.000000e+00 : f32
    %34 = vector.broadcast %cst_19 : f32 to vector<8x32xf32>
    %35 = arith.addf %34, %33 : vector<8x32xf32>
    %36 = arith.divf %34, %35 : vector<8x32xf32>
    %37 = arith.mulf %28, %11 : vector<8x32xf32>
    %38 = arith.mulf %22, %30 : vector<8x32xf32>
    %39 = arith.addf %37, %38 : vector<8x32xf32>
    %40 = math.tanh %39 : vector<8x32xf32>
    %41 = arith.mulf %36, %40 : vector<8x32xf32>
    %42 = tpu.concatenate %41, %12 in 1 : vector<8x32xf32>, vector<8x32xf32> -> vector<8x64xf32>
    %cst_20 = arith.constant dense<0.000000e+00> : vector<8x128xf32>
    %43 = tpu.matmul %42, %8, %cst_20 {dimension_numbers = #tpu.dot_dimension_numbers<[1], [0], [0], [1], [0, 0, 1, 1], [], []>} : vector<8x64xf32>, vector<64x128xf32>, vector<8x128xf32> -> vector<8x128xf32>
    %44 = vector.broadcast %9 : vector<1x128xf32> to vector<8x128xf32>
    %45 = arith.addf %43, %44 : vector<8x128xf32>
    %46 = vector.extract_strided_slice %45 {offsets = [0, 0], sizes = [8, 32], strides = [1, 1]} : vector<8x128xf32> to vector<8x32xf32>
    %47 = arith.negf %46 : vector<8x32xf32>
    %48 = math.exp %47 : vector<8x32xf32>
    %cst_21 = arith.constant 1.000000e+00 : f32
    %49 = vector.broadcast %cst_21 : f32 to vector<8x32xf32>
    %50 = arith.addf %49, %48 : vector<8x32xf32>
    %51 = arith.divf %49, %50 : vector<8x32xf32>
    %52 = vector.extract_strided_slice %45 {offsets = [0, 32], sizes = [8, 32], strides = [1, 1]} : vector<8x128xf32> to vector<8x32xf32>
    %53 = arith.negf %52 : vector<8x32xf32>
    %54 = math.exp %53 : vector<8x32xf32>
    %cst_22 = arith.constant 1.000000e+00 : f32
    %55 = vector.broadcast %cst_22 : f32 to vector<8x32xf32>
    %56 = arith.addf %55, %54 : vector<8x32xf32>
    %57 = arith.divf %55, %56 : vector<8x32xf32>
    %58 = vector.extract_strided_slice %45 {offsets = [0, 64], sizes = [8, 32], strides = [1, 1]} : vector<8x128xf32> to vector<8x32xf32>
    %59 = math.tanh %58 : vector<8x32xf32>
    %60 = vector.extract_strided_slice %45 {offsets = [0, 96], sizes = [8, 32], strides = [1, 1]} : vector<8x128xf32> to vector<8x32xf32>
    %61 = arith.negf %60 : vector<8x32xf32>
    %62 = math.exp %61 : vector<8x32xf32>
    %cst_23 = arith.constant 1.000000e+00 : f32
    %63 = vector.broadcast %cst_23 : f32 to vector<8x32xf32>
    %64 = arith.addf %63, %62 : vector<8x32xf32>
    %65 = arith.divf %63, %64 : vector<8x32xf32>
    %66 = arith.mulf %57, %13 : vector<8x32xf32>
    %67 = arith.mulf %51, %59 : vector<8x32xf32>
    %68 = arith.addf %66, %67 : vector<8x32xf32>
    %69 = math.tanh %68 : vector<8x32xf32>
    %70 = arith.mulf %65, %69 : vector<8x32xf32>
    %71 = vector.extract_strided_slice %6 {offsets = [8, 0], sizes = [8, 128], strides = [1, 1]} : vector<64x128xf32> to vector<8x128xf32>
    %cst_24 = arith.constant dense<0.000000e+00> : vector<8x128xf32>
    %72 = tpu.matmul %41, %7, %cst_24 {dimension_numbers = #tpu.dot_dimension_numbers<[1], [0], [0], [1], [0, 0, 1, 1], [], []>} : vector<8x32xf32>, vector<32x128xf32>, vector<8x128xf32> -> vector<8x128xf32>
    %73 = arith.addf %71, %72 : vector<8x128xf32>
    %74 = vector.extract_strided_slice %73 {offsets = [0, 0], sizes = [8, 32], strides = [1, 1]} : vector<8x128xf32> to vector<8x32xf32>
    %75 = arith.negf %74 : vector<8x32xf32>
    %76 = math.exp %75 : vector<8x32xf32>
    %cst_25 = arith.constant 1.000000e+00 : f32
    %77 = vector.broadcast %cst_25 : f32 to vector<8x32xf32>
    %78 = arith.addf %77, %76 : vector<8x32xf32>
    %79 = arith.divf %77, %78 : vector<8x32xf32>
    %80 = vector.extract_strided_slice %73 {offsets = [0, 32], sizes = [8, 32], strides = [1, 1]} : vector<8x128xf32> to vector<8x32xf32>
    %81 = arith.negf %80 : vector<8x32xf32>
    %82 = math.exp %81 : vector<8x32xf32>
    %cst_26 = arith.constant 1.000000e+00 : f32
    %83 = vector.broadcast %cst_26 : f32 to vector<8x32xf32>
    %84 = arith.addf %83, %82 : vector<8x32xf32>
    %85 = arith.divf %83, %84 : vector<8x32xf32>
    %86 = vector.extract_strided_slice %73 {offsets = [0, 64], sizes = [8, 32], strides = [1, 1]} : vector<8x128xf32> to vector<8x32xf32>
    %87 = math.tanh %86 : vector<8x32xf32>
    %88 = vector.extract_strided_slice %73 {offsets = [0, 96], sizes = [8, 32], strides = [1, 1]} : vector<8x128xf32> to vector<8x32xf32>
    %89 = arith.negf %88 : vector<8x32xf32>
    %90 = math.exp %89 : vector<8x32xf32>
    %cst_27 = arith.constant 1.000000e+00 : f32
    %91 = vector.broadcast %cst_27 : f32 to vector<8x32xf32>
    %92 = arith.addf %91, %90 : vector<8x32xf32>
    %93 = arith.divf %91, %92 : vector<8x32xf32>
    %94 = arith.mulf %85, %39 : vector<8x32xf32>
    %95 = arith.mulf %79, %87 : vector<8x32xf32>
    %96 = arith.addf %94, %95 : vector<8x32xf32>
    %97 = math.tanh %96 : vector<8x32xf32>
    %98 = arith.mulf %93, %97 : vector<8x32xf32>
    %99 = tpu.concatenate %98, %70 in 1 : vector<8x32xf32>, vector<8x32xf32> -> vector<8x64xf32>
    %cst_28 = arith.constant dense<0.000000e+00> : vector<8x128xf32>
    %100 = tpu.matmul %99, %8, %cst_28 {dimension_numbers = #tpu.dot_dimension_numbers<[1], [0], [0], [1], [0, 0, 1, 1], [], []>} : vector<8x64xf32>, vector<64x128xf32>, vector<8x128xf32> -> vector<8x128xf32>
    %101 = vector.broadcast %9 : vector<1x128xf32> to vector<8x128xf32>
    %102 = arith.addf %100, %101 : vector<8x128xf32>
    %103 = vector.extract_strided_slice %102 {offsets = [0, 0], sizes = [8, 32], strides = [1, 1]} : vector<8x128xf32> to vector<8x32xf32>
    %104 = arith.negf %103 : vector<8x32xf32>
    %105 = math.exp %104 : vector<8x32xf32>
    %cst_29 = arith.constant 1.000000e+00 : f32
    %106 = vector.broadcast %cst_29 : f32 to vector<8x32xf32>
    %107 = arith.addf %106, %105 : vector<8x32xf32>
    %108 = arith.divf %106, %107 : vector<8x32xf32>
    %109 = vector.extract_strided_slice %102 {offsets = [0, 32], sizes = [8, 32], strides = [1, 1]} : vector<8x128xf32> to vector<8x32xf32>
    %110 = arith.negf %109 : vector<8x32xf32>
    %111 = math.exp %110 : vector<8x32xf32>
    %cst_30 = arith.constant 1.000000e+00 : f32
    %112 = vector.broadcast %cst_30 : f32 to vector<8x32xf32>
    %113 = arith.addf %112, %111 : vector<8x32xf32>
    %114 = arith.divf %112, %113 : vector<8x32xf32>
    %115 = vector.extract_strided_slice %102 {offsets = [0, 64], sizes = [8, 32], strides = [1, 1]} : vector<8x128xf32> to vector<8x32xf32>
    %116 = math.tanh %115 : vector<8x32xf32>
    %117 = vector.extract_strided_slice %102 {offsets = [0, 96], sizes = [8, 32], strides = [1, 1]} : vector<8x128xf32> to vector<8x32xf32>
    %118 = arith.negf %117 : vector<8x32xf32>
    %119 = math.exp %118 : vector<8x32xf32>
    %cst_31 = arith.constant 1.000000e+00 : f32
    %120 = vector.broadcast %cst_31 : f32 to vector<8x32xf32>
    %121 = arith.addf %120, %119 : vector<8x32xf32>
    %122 = arith.divf %120, %121 : vector<8x32xf32>
    %123 = arith.mulf %114, %68 : vector<8x32xf32>
    %124 = arith.mulf %108, %116 : vector<8x32xf32>
    %125 = arith.addf %123, %124 : vector<8x32xf32>
    %126 = math.tanh %125 : vector<8x32xf32>
    %127 = arith.mulf %122, %126 : vector<8x32xf32>
    %128 = vector.extract_strided_slice %6 {offsets = [16, 0], sizes = [8, 128], strides = [1, 1]} : vector<64x128xf32> to vector<8x128xf32>
    %cst_32 = arith.constant dense<0.000000e+00> : vector<8x128xf32>
    %129 = tpu.matmul %98, %7, %cst_32 {dimension_numbers = #tpu.dot_dimension_numbers<[1], [0], [0], [1], [0, 0, 1, 1], [], []>} : vector<8x32xf32>, vector<32x128xf32>, vector<8x128xf32> -> vector<8x128xf32>
    %130 = arith.addf %128, %129 : vector<8x128xf32>
    %131 = vector.extract_strided_slice %130 {offsets = [0, 0], sizes = [8, 32], strides = [1, 1]} : vector<8x128xf32> to vector<8x32xf32>
    %132 = arith.negf %131 : vector<8x32xf32>
    %133 = math.exp %132 : vector<8x32xf32>
    %cst_33 = arith.constant 1.000000e+00 : f32
    %134 = vector.broadcast %cst_33 : f32 to vector<8x32xf32>
    %135 = arith.addf %134, %133 : vector<8x32xf32>
    %136 = arith.divf %134, %135 : vector<8x32xf32>
    %137 = vector.extract_strided_slice %130 {offsets = [0, 32], sizes = [8, 32], strides = [1, 1]} : vector<8x128xf32> to vector<8x32xf32>
    %138 = arith.negf %137 : vector<8x32xf32>
    %139 = math.exp %138 : vector<8x32xf32>
    %cst_34 = arith.constant 1.000000e+00 : f32
    %140 = vector.broadcast %cst_34 : f32 to vector<8x32xf32>
    %141 = arith.addf %140, %139 : vector<8x32xf32>
    %142 = arith.divf %140, %141 : vector<8x32xf32>
    %143 = vector.extract_strided_slice %130 {offsets = [0, 64], sizes = [8, 32], strides = [1, 1]} : vector<8x128xf32> to vector<8x32xf32>
    %144 = math.tanh %143 : vector<8x32xf32>
    %145 = vector.extract_strided_slice %130 {offsets = [0, 96], sizes = [8, 32], strides = [1, 1]} : vector<8x128xf32> to vector<8x32xf32>
    %146 = arith.negf %145 : vector<8x32xf32>
    %147 = math.exp %146 : vector<8x32xf32>
    %cst_35 = arith.constant 1.000000e+00 : f32
    %148 = vector.broadcast %cst_35 : f32 to vector<8x32xf32>
    %149 = arith.addf %148, %147 : vector<8x32xf32>
    %150 = arith.divf %148, %149 : vector<8x32xf32>
    %151 = arith.mulf %142, %96 : vector<8x32xf32>
    %152 = arith.mulf %136, %144 : vector<8x32xf32>
    %153 = arith.addf %151, %152 : vector<8x32xf32>
    %154 = math.tanh %153 : vector<8x32xf32>
    %155 = arith.mulf %150, %154 : vector<8x32xf32>
    %156 = tpu.concatenate %155, %127 in 1 : vector<8x32xf32>, vector<8x32xf32> -> vector<8x64xf32>
    %cst_36 = arith.constant dense<0.000000e+00> : vector<8x128xf32>
    %157 = tpu.matmul %156, %8, %cst_36 {dimension_numbers = #tpu.dot_dimension_numbers<[1], [0], [0], [1], [0, 0, 1, 1], [], []>} : vector<8x64xf32>, vector<64x128xf32>, vector<8x128xf32> -> vector<8x128xf32>
    %158 = vector.broadcast %9 : vector<1x128xf32> to vector<8x128xf32>
    %159 = arith.addf %157, %158 : vector<8x128xf32>
    %160 = vector.extract_strided_slice %159 {offsets = [0, 0], sizes = [8, 32], strides = [1, 1]} : vector<8x128xf32> to vector<8x32xf32>
    %161 = arith.negf %160 : vector<8x32xf32>
    %162 = math.exp %161 : vector<8x32xf32>
    %cst_37 = arith.constant 1.000000e+00 : f32
    %163 = vector.broadcast %cst_37 : f32 to vector<8x32xf32>
    %164 = arith.addf %163, %162 : vector<8x32xf32>
    %165 = arith.divf %163, %164 : vector<8x32xf32>
    %166 = vector.extract_strided_slice %159 {offsets = [0, 32], sizes = [8, 32], strides = [1, 1]} : vector<8x128xf32> to vector<8x32xf32>
    %167 = arith.negf %166 : vector<8x32xf32>
    %168 = math.exp %167 : vector<8x32xf32>
    %cst_38 = arith.constant 1.000000e+00 : f32
    %169 = vector.broadcast %cst_38 : f32 to vector<8x32xf32>
    %170 = arith.addf %169, %168 : vector<8x32xf32>
    %171 = arith.divf %169, %170 : vector<8x32xf32>
    %172 = vector.extract_strided_slice %159 {offsets = [0, 64], sizes = [8, 32], strides = [1, 1]} : vector<8x128xf32> to vector<8x32xf32>
    %173 = math.tanh %172 : vector<8x32xf32>
    %174 = vector.extract_strided_slice %159 {offsets = [0, 96], sizes = [8, 32], strides = [1, 1]} : vector<8x128xf32> to vector<8x32xf32>
    %175 = arith.negf %174 : vector<8x32xf32>
    %176 = math.exp %175 : vector<8x32xf32>
    %cst_39 = arith.constant 1.000000e+00 : f32
    %177 = vector.broadcast %cst_39 : f32 to vector<8x32xf32>
    %178 = arith.addf %177, %176 : vector<8x32xf32>
    %179 = arith.divf %177, %178 : vector<8x32xf32>
    %180 = arith.mulf %171, %125 : vector<8x32xf32>
    %181 = arith.mulf %165, %173 : vector<8x32xf32>
    %182 = arith.addf %180, %181 : vector<8x32xf32>
    %183 = math.tanh %182 : vector<8x32xf32>
    %184 = arith.mulf %179, %183 : vector<8x32xf32>
    %185 = vector.extract_strided_slice %6 {offsets = [24, 0], sizes = [8, 128], strides = [1, 1]} : vector<64x128xf32> to vector<8x128xf32>
    %cst_40 = arith.constant dense<0.000000e+00> : vector<8x128xf32>
    %186 = tpu.matmul %155, %7, %cst_40 {dimension_numbers = #tpu.dot_dimension_numbers<[1], [0], [0], [1], [0, 0, 1, 1], [], []>} : vector<8x32xf32>, vector<32x128xf32>, vector<8x128xf32> -> vector<8x128xf32>
    %187 = arith.addf %185, %186 : vector<8x128xf32>
    %188 = vector.extract_strided_slice %187 {offsets = [0, 0], sizes = [8, 32], strides = [1, 1]} : vector<8x128xf32> to vector<8x32xf32>
    %189 = arith.negf %188 : vector<8x32xf32>
    %190 = math.exp %189 : vector<8x32xf32>
    %cst_41 = arith.constant 1.000000e+00 : f32
    %191 = vector.broadcast %cst_41 : f32 to vector<8x32xf32>
    %192 = arith.addf %191, %190 : vector<8x32xf32>
    %193 = arith.divf %191, %192 : vector<8x32xf32>
    %194 = vector.extract_strided_slice %187 {offsets = [0, 32], sizes = [8, 32], strides = [1, 1]} : vector<8x128xf32> to vector<8x32xf32>
    %195 = arith.negf %194 : vector<8x32xf32>
    %196 = math.exp %195 : vector<8x32xf32>
    %cst_42 = arith.constant 1.000000e+00 : f32
    %197 = vector.broadcast %cst_42 : f32 to vector<8x32xf32>
    %198 = arith.addf %197, %196 : vector<8x32xf32>
    %199 = arith.divf %197, %198 : vector<8x32xf32>
    %200 = vector.extract_strided_slice %187 {offsets = [0, 64], sizes = [8, 32], strides = [1, 1]} : vector<8x128xf32> to vector<8x32xf32>
    %201 = math.tanh %200 : vector<8x32xf32>
    %202 = vector.extract_strided_slice %187 {offsets = [0, 96], sizes = [8, 32], strides = [1, 1]} : vector<8x128xf32> to vector<8x32xf32>
    %203 = arith.negf %202 : vector<8x32xf32>
    %204 = math.exp %203 : vector<8x32xf32>
    %cst_43 = arith.constant 1.000000e+00 : f32
    %205 = vector.broadcast %cst_43 : f32 to vector<8x32xf32>
    %206 = arith.addf %205, %204 : vector<8x32xf32>
    %207 = arith.divf %205, %206 : vector<8x32xf32>
    %208 = arith.mulf %199, %153 : vector<8x32xf32>
    %209 = arith.mulf %193, %201 : vector<8x32xf32>
    %210 = arith.addf %208, %209 : vector<8x32xf32>
    %211 = math.tanh %210 : vector<8x32xf32>
    %212 = arith.mulf %207, %211 : vector<8x32xf32>
    %213 = tpu.concatenate %212, %184 in 1 : vector<8x32xf32>, vector<8x32xf32> -> vector<8x64xf32>
    %cst_44 = arith.constant dense<0.000000e+00> : vector<8x128xf32>
    %214 = tpu.matmul %213, %8, %cst_44 {dimension_numbers = #tpu.dot_dimension_numbers<[1], [0], [0], [1], [0, 0, 1, 1], [], []>} : vector<8x64xf32>, vector<64x128xf32>, vector<8x128xf32> -> vector<8x128xf32>
    %215 = vector.broadcast %9 : vector<1x128xf32> to vector<8x128xf32>
    %216 = arith.addf %214, %215 : vector<8x128xf32>
    %217 = vector.extract_strided_slice %216 {offsets = [0, 0], sizes = [8, 32], strides = [1, 1]} : vector<8x128xf32> to vector<8x32xf32>
    %218 = arith.negf %217 : vector<8x32xf32>
    %219 = math.exp %218 : vector<8x32xf32>
    %cst_45 = arith.constant 1.000000e+00 : f32
    %220 = vector.broadcast %cst_45 : f32 to vector<8x32xf32>
    %221 = arith.addf %220, %219 : vector<8x32xf32>
    %222 = arith.divf %220, %221 : vector<8x32xf32>
    %223 = vector.extract_strided_slice %216 {offsets = [0, 32], sizes = [8, 32], strides = [1, 1]} : vector<8x128xf32> to vector<8x32xf32>
    %224 = arith.negf %223 : vector<8x32xf32>
    %225 = math.exp %224 : vector<8x32xf32>
    %cst_46 = arith.constant 1.000000e+00 : f32
    %226 = vector.broadcast %cst_46 : f32 to vector<8x32xf32>
    %227 = arith.addf %226, %225 : vector<8x32xf32>
    %228 = arith.divf %226, %227 : vector<8x32xf32>
    %229 = vector.extract_strided_slice %216 {offsets = [0, 64], sizes = [8, 32], strides = [1, 1]} : vector<8x128xf32> to vector<8x32xf32>
    %230 = math.tanh %229 : vector<8x32xf32>
    %231 = vector.extract_strided_slice %216 {offsets = [0, 96], sizes = [8, 32], strides = [1, 1]} : vector<8x128xf32> to vector<8x32xf32>
    %232 = arith.negf %231 : vector<8x32xf32>
    %233 = math.exp %232 : vector<8x32xf32>
    %cst_47 = arith.constant 1.000000e+00 : f32
    %234 = vector.broadcast %cst_47 : f32 to vector<8x32xf32>
    %235 = arith.addf %234, %233 : vector<8x32xf32>
    %236 = arith.divf %234, %235 : vector<8x32xf32>
    %237 = arith.mulf %228, %182 : vector<8x32xf32>
    %238 = arith.mulf %222, %230 : vector<8x32xf32>
    %239 = arith.addf %237, %238 : vector<8x32xf32>
    %240 = math.tanh %239 : vector<8x32xf32>
    %241 = arith.mulf %236, %240 : vector<8x32xf32>
    %242 = vector.extract_strided_slice %6 {offsets = [32, 0], sizes = [8, 128], strides = [1, 1]} : vector<64x128xf32> to vector<8x128xf32>
    %cst_48 = arith.constant dense<0.000000e+00> : vector<8x128xf32>
    %243 = tpu.matmul %212, %7, %cst_48 {dimension_numbers = #tpu.dot_dimension_numbers<[1], [0], [0], [1], [0, 0, 1, 1], [], []>} : vector<8x32xf32>, vector<32x128xf32>, vector<8x128xf32> -> vector<8x128xf32>
    %244 = arith.addf %242, %243 : vector<8x128xf32>
    %245 = vector.extract_strided_slice %244 {offsets = [0, 0], sizes = [8, 32], strides = [1, 1]} : vector<8x128xf32> to vector<8x32xf32>
    %246 = arith.negf %245 : vector<8x32xf32>
    %247 = math.exp %246 : vector<8x32xf32>
    %cst_49 = arith.constant 1.000000e+00 : f32
    %248 = vector.broadcast %cst_49 : f32 to vector<8x32xf32>
    %249 = arith.addf %248, %247 : vector<8x32xf32>
    %250 = arith.divf %248, %249 : vector<8x32xf32>
    %251 = vector.extract_strided_slice %244 {offsets = [0, 32], sizes = [8, 32], strides = [1, 1]} : vector<8x128xf32> to vector<8x32xf32>
    %252 = arith.negf %251 : vector<8x32xf32>
    %253 = math.exp %252 : vector<8x32xf32>
    %cst_50 = arith.constant 1.000000e+00 : f32
    %254 = vector.broadcast %cst_50 : f32 to vector<8x32xf32>
    %255 = arith.addf %254, %253 : vector<8x32xf32>
    %256 = arith.divf %254, %255 : vector<8x32xf32>
    %257 = vector.extract_strided_slice %244 {offsets = [0, 64], sizes = [8, 32], strides = [1, 1]} : vector<8x128xf32> to vector<8x32xf32>
    %258 = math.tanh %257 : vector<8x32xf32>
    %259 = vector.extract_strided_slice %244 {offsets = [0, 96], sizes = [8, 32], strides = [1, 1]} : vector<8x128xf32> to vector<8x32xf32>
    %260 = arith.negf %259 : vector<8x32xf32>
    %261 = math.exp %260 : vector<8x32xf32>
    %cst_51 = arith.constant 1.000000e+00 : f32
    %262 = vector.broadcast %cst_51 : f32 to vector<8x32xf32>
    %263 = arith.addf %262, %261 : vector<8x32xf32>
    %264 = arith.divf %262, %263 : vector<8x32xf32>
    %265 = arith.mulf %256, %210 : vector<8x32xf32>
    %266 = arith.mulf %250, %258 : vector<8x32xf32>
    %267 = arith.addf %265, %266 : vector<8x32xf32>
    %268 = math.tanh %267 : vector<8x32xf32>
    %269 = arith.mulf %264, %268 : vector<8x32xf32>
    %270 = tpu.concatenate %269, %241 in 1 : vector<8x32xf32>, vector<8x32xf32> -> vector<8x64xf32>
    %cst_52 = arith.constant dense<0.000000e+00> : vector<8x128xf32>
    %271 = tpu.matmul %270, %8, %cst_52 {dimension_numbers = #tpu.dot_dimension_numbers<[1], [0], [0], [1], [0, 0, 1, 1], [], []>} : vector<8x64xf32>, vector<64x128xf32>, vector<8x128xf32> -> vector<8x128xf32>
    %272 = vector.broadcast %9 : vector<1x128xf32> to vector<8x128xf32>
    %273 = arith.addf %271, %272 : vector<8x128xf32>
    %274 = vector.extract_strided_slice %273 {offsets = [0, 0], sizes = [8, 32], strides = [1, 1]} : vector<8x128xf32> to vector<8x32xf32>
    %275 = arith.negf %274 : vector<8x32xf32>
    %276 = math.exp %275 : vector<8x32xf32>
    %cst_53 = arith.constant 1.000000e+00 : f32
    %277 = vector.broadcast %cst_53 : f32 to vector<8x32xf32>
    %278 = arith.addf %277, %276 : vector<8x32xf32>
    %279 = arith.divf %277, %278 : vector<8x32xf32>
    %280 = vector.extract_strided_slice %273 {offsets = [0, 32], sizes = [8, 32], strides = [1, 1]} : vector<8x128xf32> to vector<8x32xf32>
    %281 = arith.negf %280 : vector<8x32xf32>
    %282 = math.exp %281 : vector<8x32xf32>
    %cst_54 = arith.constant 1.000000e+00 : f32
    %283 = vector.broadcast %cst_54 : f32 to vector<8x32xf32>
    %284 = arith.addf %283, %282 : vector<8x32xf32>
    %285 = arith.divf %283, %284 : vector<8x32xf32>
    %286 = vector.extract_strided_slice %273 {offsets = [0, 64], sizes = [8, 32], strides = [1, 1]} : vector<8x128xf32> to vector<8x32xf32>
    %287 = math.tanh %286 : vector<8x32xf32>
    %288 = vector.extract_strided_slice %273 {offsets = [0, 96], sizes = [8, 32], strides = [1, 1]} : vector<8x128xf32> to vector<8x32xf32>
    %289 = arith.negf %288 : vector<8x32xf32>
    %290 = math.exp %289 : vector<8x32xf32>
    %cst_55 = arith.constant 1.000000e+00 : f32
    %291 = vector.broadcast %cst_55 : f32 to vector<8x32xf32>
    %292 = arith.addf %291, %290 : vector<8x32xf32>
    %293 = arith.divf %291, %292 : vector<8x32xf32>
    %294 = arith.mulf %285, %239 : vector<8x32xf32>
    %295 = arith.mulf %279, %287 : vector<8x32xf32>
    %296 = arith.addf %294, %295 : vector<8x32xf32>
    %297 = math.tanh %296 : vector<8x32xf32>
    %298 = arith.mulf %293, %297 : vector<8x32xf32>
    %299 = vector.extract_strided_slice %6 {offsets = [40, 0], sizes = [8, 128], strides = [1, 1]} : vector<64x128xf32> to vector<8x128xf32>
    %cst_56 = arith.constant dense<0.000000e+00> : vector<8x128xf32>
    %300 = tpu.matmul %269, %7, %cst_56 {dimension_numbers = #tpu.dot_dimension_numbers<[1], [0], [0], [1], [0, 0, 1, 1], [], []>} : vector<8x32xf32>, vector<32x128xf32>, vector<8x128xf32> -> vector<8x128xf32>
    %301 = arith.addf %299, %300 : vector<8x128xf32>
    %302 = vector.extract_strided_slice %301 {offsets = [0, 0], sizes = [8, 32], strides = [1, 1]} : vector<8x128xf32> to vector<8x32xf32>
    %303 = arith.negf %302 : vector<8x32xf32>
    %304 = math.exp %303 : vector<8x32xf32>
    %cst_57 = arith.constant 1.000000e+00 : f32
    %305 = vector.broadcast %cst_57 : f32 to vector<8x32xf32>
    %306 = arith.addf %305, %304 : vector<8x32xf32>
    %307 = arith.divf %305, %306 : vector<8x32xf32>
    %308 = vector.extract_strided_slice %301 {offsets = [0, 32], sizes = [8, 32], strides = [1, 1]} : vector<8x128xf32> to vector<8x32xf32>
    %309 = arith.negf %308 : vector<8x32xf32>
    %310 = math.exp %309 : vector<8x32xf32>
    %cst_58 = arith.constant 1.000000e+00 : f32
    %311 = vector.broadcast %cst_58 : f32 to vector<8x32xf32>
    %312 = arith.addf %311, %310 : vector<8x32xf32>
    %313 = arith.divf %311, %312 : vector<8x32xf32>
    %314 = vector.extract_strided_slice %301 {offsets = [0, 64], sizes = [8, 32], strides = [1, 1]} : vector<8x128xf32> to vector<8x32xf32>
    %315 = math.tanh %314 : vector<8x32xf32>
    %316 = vector.extract_strided_slice %301 {offsets = [0, 96], sizes = [8, 32], strides = [1, 1]} : vector<8x128xf32> to vector<8x32xf32>
    %317 = arith.negf %316 : vector<8x32xf32>
    %318 = math.exp %317 : vector<8x32xf32>
    %cst_59 = arith.constant 1.000000e+00 : f32
    %319 = vector.broadcast %cst_59 : f32 to vector<8x32xf32>
    %320 = arith.addf %319, %318 : vector<8x32xf32>
    %321 = arith.divf %319, %320 : vector<8x32xf32>
    %322 = arith.mulf %313, %267 : vector<8x32xf32>
    %323 = arith.mulf %307, %315 : vector<8x32xf32>
    %324 = arith.addf %322, %323 : vector<8x32xf32>
    %325 = math.tanh %324 : vector<8x32xf32>
    %326 = arith.mulf %321, %325 : vector<8x32xf32>
    %327 = tpu.concatenate %326, %298 in 1 : vector<8x32xf32>, vector<8x32xf32> -> vector<8x64xf32>
    %cst_60 = arith.constant dense<0.000000e+00> : vector<8x128xf32>
    %328 = tpu.matmul %327, %8, %cst_60 {dimension_numbers = #tpu.dot_dimension_numbers<[1], [0], [0], [1], [0, 0, 1, 1], [], []>} : vector<8x64xf32>, vector<64x128xf32>, vector<8x128xf32> -> vector<8x128xf32>
    %329 = vector.broadcast %9 : vector<1x128xf32> to vector<8x128xf32>
    %330 = arith.addf %328, %329 : vector<8x128xf32>
    %331 = vector.extract_strided_slice %330 {offsets = [0, 0], sizes = [8, 32], strides = [1, 1]} : vector<8x128xf32> to vector<8x32xf32>
    %332 = arith.negf %331 : vector<8x32xf32>
    %333 = math.exp %332 : vector<8x32xf32>
    %cst_61 = arith.constant 1.000000e+00 : f32
    %334 = vector.broadcast %cst_61 : f32 to vector<8x32xf32>
    %335 = arith.addf %334, %333 : vector<8x32xf32>
    %336 = arith.divf %334, %335 : vector<8x32xf32>
    %337 = vector.extract_strided_slice %330 {offsets = [0, 32], sizes = [8, 32], strides = [1, 1]} : vector<8x128xf32> to vector<8x32xf32>
    %338 = arith.negf %337 : vector<8x32xf32>
    %339 = math.exp %338 : vector<8x32xf32>
    %cst_62 = arith.constant 1.000000e+00 : f32
    %340 = vector.broadcast %cst_62 : f32 to vector<8x32xf32>
    %341 = arith.addf %340, %339 : vector<8x32xf32>
    %342 = arith.divf %340, %341 : vector<8x32xf32>
    %343 = vector.extract_strided_slice %330 {offsets = [0, 64], sizes = [8, 32], strides = [1, 1]} : vector<8x128xf32> to vector<8x32xf32>
    %344 = math.tanh %343 : vector<8x32xf32>
    %345 = vector.extract_strided_slice %330 {offsets = [0, 96], sizes = [8, 32], strides = [1, 1]} : vector<8x128xf32> to vector<8x32xf32>
    %346 = arith.negf %345 : vector<8x32xf32>
    %347 = math.exp %346 : vector<8x32xf32>
    %cst_63 = arith.constant 1.000000e+00 : f32
    %348 = vector.broadcast %cst_63 : f32 to vector<8x32xf32>
    %349 = arith.addf %348, %347 : vector<8x32xf32>
    %350 = arith.divf %348, %349 : vector<8x32xf32>
    %351 = arith.mulf %342, %296 : vector<8x32xf32>
    %352 = arith.mulf %336, %344 : vector<8x32xf32>
    %353 = arith.addf %351, %352 : vector<8x32xf32>
    %354 = math.tanh %353 : vector<8x32xf32>
    %355 = arith.mulf %350, %354 : vector<8x32xf32>
    %356 = vector.extract_strided_slice %6 {offsets = [48, 0], sizes = [8, 128], strides = [1, 1]} : vector<64x128xf32> to vector<8x128xf32>
    %cst_64 = arith.constant dense<0.000000e+00> : vector<8x128xf32>
    %357 = tpu.matmul %326, %7, %cst_64 {dimension_numbers = #tpu.dot_dimension_numbers<[1], [0], [0], [1], [0, 0, 1, 1], [], []>} : vector<8x32xf32>, vector<32x128xf32>, vector<8x128xf32> -> vector<8x128xf32>
    %358 = arith.addf %356, %357 : vector<8x128xf32>
    %359 = vector.extract_strided_slice %358 {offsets = [0, 0], sizes = [8, 32], strides = [1, 1]} : vector<8x128xf32> to vector<8x32xf32>
    %360 = arith.negf %359 : vector<8x32xf32>
    %361 = math.exp %360 : vector<8x32xf32>
    %cst_65 = arith.constant 1.000000e+00 : f32
    %362 = vector.broadcast %cst_65 : f32 to vector<8x32xf32>
    %363 = arith.addf %362, %361 : vector<8x32xf32>
    %364 = arith.divf %362, %363 : vector<8x32xf32>
    %365 = vector.extract_strided_slice %358 {offsets = [0, 32], sizes = [8, 32], strides = [1, 1]} : vector<8x128xf32> to vector<8x32xf32>
    %366 = arith.negf %365 : vector<8x32xf32>
    %367 = math.exp %366 : vector<8x32xf32>
    %cst_66 = arith.constant 1.000000e+00 : f32
    %368 = vector.broadcast %cst_66 : f32 to vector<8x32xf32>
    %369 = arith.addf %368, %367 : vector<8x32xf32>
    %370 = arith.divf %368, %369 : vector<8x32xf32>
    %371 = vector.extract_strided_slice %358 {offsets = [0, 64], sizes = [8, 32], strides = [1, 1]} : vector<8x128xf32> to vector<8x32xf32>
    %372 = math.tanh %371 : vector<8x32xf32>
    %373 = vector.extract_strided_slice %358 {offsets = [0, 96], sizes = [8, 32], strides = [1, 1]} : vector<8x128xf32> to vector<8x32xf32>
    %374 = arith.negf %373 : vector<8x32xf32>
    %375 = math.exp %374 : vector<8x32xf32>
    %cst_67 = arith.constant 1.000000e+00 : f32
    %376 = vector.broadcast %cst_67 : f32 to vector<8x32xf32>
    %377 = arith.addf %376, %375 : vector<8x32xf32>
    %378 = arith.divf %376, %377 : vector<8x32xf32>
    %379 = arith.mulf %370, %324 : vector<8x32xf32>
    %380 = arith.mulf %364, %372 : vector<8x32xf32>
    %381 = arith.addf %379, %380 : vector<8x32xf32>
    %382 = math.tanh %381 : vector<8x32xf32>
    %383 = arith.mulf %378, %382 : vector<8x32xf32>
    %384 = tpu.concatenate %383, %355 in 1 : vector<8x32xf32>, vector<8x32xf32> -> vector<8x64xf32>
    %cst_68 = arith.constant dense<0.000000e+00> : vector<8x128xf32>
    %385 = tpu.matmul %384, %8, %cst_68 {dimension_numbers = #tpu.dot_dimension_numbers<[1], [0], [0], [1], [0, 0, 1, 1], [], []>} : vector<8x64xf32>, vector<64x128xf32>, vector<8x128xf32> -> vector<8x128xf32>
    %386 = vector.broadcast %9 : vector<1x128xf32> to vector<8x128xf32>
    %387 = arith.addf %385, %386 : vector<8x128xf32>
    %388 = vector.extract_strided_slice %387 {offsets = [0, 0], sizes = [8, 32], strides = [1, 1]} : vector<8x128xf32> to vector<8x32xf32>
    %389 = arith.negf %388 : vector<8x32xf32>
    %390 = math.exp %389 : vector<8x32xf32>
    %cst_69 = arith.constant 1.000000e+00 : f32
    %391 = vector.broadcast %cst_69 : f32 to vector<8x32xf32>
    %392 = arith.addf %391, %390 : vector<8x32xf32>
    %393 = arith.divf %391, %392 : vector<8x32xf32>
    %394 = vector.extract_strided_slice %387 {offsets = [0, 32], sizes = [8, 32], strides = [1, 1]} : vector<8x128xf32> to vector<8x32xf32>
    %395 = arith.negf %394 : vector<8x32xf32>
    %396 = math.exp %395 : vector<8x32xf32>
    %cst_70 = arith.constant 1.000000e+00 : f32
    %397 = vector.broadcast %cst_70 : f32 to vector<8x32xf32>
    %398 = arith.addf %397, %396 : vector<8x32xf32>
    %399 = arith.divf %397, %398 : vector<8x32xf32>
    %400 = vector.extract_strided_slice %387 {offsets = [0, 64], sizes = [8, 32], strides = [1, 1]} : vector<8x128xf32> to vector<8x32xf32>
    %401 = math.tanh %400 : vector<8x32xf32>
    %402 = vector.extract_strided_slice %387 {offsets = [0, 96], sizes = [8, 32], strides = [1, 1]} : vector<8x128xf32> to vector<8x32xf32>
    %403 = arith.negf %402 : vector<8x32xf32>
    %404 = math.exp %403 : vector<8x32xf32>
    %cst_71 = arith.constant 1.000000e+00 : f32
    %405 = vector.broadcast %cst_71 : f32 to vector<8x32xf32>
    %406 = arith.addf %405, %404 : vector<8x32xf32>
    %407 = arith.divf %405, %406 : vector<8x32xf32>
    %408 = arith.mulf %399, %353 : vector<8x32xf32>
    %409 = arith.mulf %393, %401 : vector<8x32xf32>
    %410 = arith.addf %408, %409 : vector<8x32xf32>
    %411 = math.tanh %410 : vector<8x32xf32>
    %412 = arith.mulf %407, %411 : vector<8x32xf32>
    %413 = vector.extract_strided_slice %6 {offsets = [56, 0], sizes = [8, 128], strides = [1, 1]} : vector<64x128xf32> to vector<8x128xf32>
    %cst_72 = arith.constant dense<0.000000e+00> : vector<8x128xf32>
    %414 = tpu.matmul %383, %7, %cst_72 {dimension_numbers = #tpu.dot_dimension_numbers<[1], [0], [0], [1], [0, 0, 1, 1], [], []>} : vector<8x32xf32>, vector<32x128xf32>, vector<8x128xf32> -> vector<8x128xf32>
    %415 = arith.addf %413, %414 : vector<8x128xf32>
    %416 = vector.extract_strided_slice %415 {offsets = [0, 0], sizes = [8, 32], strides = [1, 1]} : vector<8x128xf32> to vector<8x32xf32>
    %417 = arith.negf %416 : vector<8x32xf32>
    %418 = math.exp %417 : vector<8x32xf32>
    %cst_73 = arith.constant 1.000000e+00 : f32
    %419 = vector.broadcast %cst_73 : f32 to vector<8x32xf32>
    %420 = arith.addf %419, %418 : vector<8x32xf32>
    %421 = arith.divf %419, %420 : vector<8x32xf32>
    %422 = vector.extract_strided_slice %415 {offsets = [0, 32], sizes = [8, 32], strides = [1, 1]} : vector<8x128xf32> to vector<8x32xf32>
    %423 = arith.negf %422 : vector<8x32xf32>
    %424 = math.exp %423 : vector<8x32xf32>
    %cst_74 = arith.constant 1.000000e+00 : f32
    %425 = vector.broadcast %cst_74 : f32 to vector<8x32xf32>
    %426 = arith.addf %425, %424 : vector<8x32xf32>
    %427 = arith.divf %425, %426 : vector<8x32xf32>
    %428 = vector.extract_strided_slice %415 {offsets = [0, 64], sizes = [8, 32], strides = [1, 1]} : vector<8x128xf32> to vector<8x32xf32>
    %429 = math.tanh %428 : vector<8x32xf32>
    %430 = vector.extract_strided_slice %415 {offsets = [0, 96], sizes = [8, 32], strides = [1, 1]} : vector<8x128xf32> to vector<8x32xf32>
    %431 = arith.negf %430 : vector<8x32xf32>
    %432 = math.exp %431 : vector<8x32xf32>
    %cst_75 = arith.constant 1.000000e+00 : f32
    %433 = vector.broadcast %cst_75 : f32 to vector<8x32xf32>
    %434 = arith.addf %433, %432 : vector<8x32xf32>
    %435 = arith.divf %433, %434 : vector<8x32xf32>
    %436 = arith.mulf %427, %381 : vector<8x32xf32>
    %437 = arith.mulf %421, %429 : vector<8x32xf32>
    %438 = arith.addf %436, %437 : vector<8x32xf32>
    %439 = math.tanh %438 : vector<8x32xf32>
    %440 = arith.mulf %435, %439 : vector<8x32xf32>
    %441 = tpu.concatenate %440, %412 in 1 : vector<8x32xf32>, vector<8x32xf32> -> vector<8x64xf32>
    %cst_76 = arith.constant dense<0.000000e+00> : vector<8x128xf32>
    %442 = tpu.matmul %441, %8, %cst_76 {dimension_numbers = #tpu.dot_dimension_numbers<[1], [0], [0], [1], [0, 0, 1, 1], [], []>} : vector<8x64xf32>, vector<64x128xf32>, vector<8x128xf32> -> vector<8x128xf32>
    %443 = vector.broadcast %9 : vector<1x128xf32> to vector<8x128xf32>
    %444 = arith.addf %442, %443 : vector<8x128xf32>
    %445 = vector.extract_strided_slice %444 {offsets = [0, 0], sizes = [8, 32], strides = [1, 1]} : vector<8x128xf32> to vector<8x32xf32>
    %446 = arith.negf %445 : vector<8x32xf32>
    %447 = math.exp %446 : vector<8x32xf32>
    %cst_77 = arith.constant 1.000000e+00 : f32
    %448 = vector.broadcast %cst_77 : f32 to vector<8x32xf32>
    %449 = arith.addf %448, %447 : vector<8x32xf32>
    %450 = arith.divf %448, %449 : vector<8x32xf32>
    %451 = vector.extract_strided_slice %444 {offsets = [0, 32], sizes = [8, 32], strides = [1, 1]} : vector<8x128xf32> to vector<8x32xf32>
    %452 = arith.negf %451 : vector<8x32xf32>
    %453 = math.exp %452 : vector<8x32xf32>
    %cst_78 = arith.constant 1.000000e+00 : f32
    %454 = vector.broadcast %cst_78 : f32 to vector<8x32xf32>
    %455 = arith.addf %454, %453 : vector<8x32xf32>
    %456 = arith.divf %454, %455 : vector<8x32xf32>
    %457 = vector.extract_strided_slice %444 {offsets = [0, 64], sizes = [8, 32], strides = [1, 1]} : vector<8x128xf32> to vector<8x32xf32>
    %458 = math.tanh %457 : vector<8x32xf32>
    %459 = vector.extract_strided_slice %444 {offsets = [0, 96], sizes = [8, 32], strides = [1, 1]} : vector<8x128xf32> to vector<8x32xf32>
    %460 = arith.negf %459 : vector<8x32xf32>
    %461 = math.exp %460 : vector<8x32xf32>
    %cst_79 = arith.constant 1.000000e+00 : f32
    %462 = vector.broadcast %cst_79 : f32 to vector<8x32xf32>
    %463 = arith.addf %462, %461 : vector<8x32xf32>
    %464 = arith.divf %462, %463 : vector<8x32xf32>
    %465 = arith.mulf %456, %410 : vector<8x32xf32>
    %466 = arith.mulf %450, %458 : vector<8x32xf32>
    %467 = arith.addf %465, %466 : vector<8x32xf32>
    %468 = math.tanh %467 : vector<8x32xf32>
    %469 = arith.mulf %464, %468 : vector<8x32xf32>
    %c0_80 = arith.constant 0 : index
    %c0_81 = arith.constant 0 : index
    %470 = vector.load %arg7[%c0_80, %c0_81] : memref<32x128xf32, #tpu.memory_space<vmem>>, vector<32x128xf32>
    %cst_82 = arith.constant dense<0.000000e+00> : vector<8x128xf32>
    %471 = tpu.matmul %469, %470, %cst_82 {dimension_numbers = #tpu.dot_dimension_numbers<[1], [0], [0], [1], [0, 0, 1, 1], [], []>} : vector<8x32xf32>, vector<32x128xf32>, vector<8x128xf32> -> vector<8x128xf32>
    %c0_83 = arith.constant 0 : index
    %c0_84 = arith.constant 0 : index
    %472 = vector.load %arg8[%c0_83, %c0_84] : memref<1x128xf32, #tpu.memory_space<vmem>>, vector<1x128xf32>
    %473 = vector.broadcast %472 : vector<1x128xf32> to vector<8x128xf32>
    %474 = arith.addf %471, %473 : vector<8x128xf32>
    %c0_85 = arith.constant 0 : index
    %c0_86 = arith.constant 0 : index
    %475 = vector.load %arg9[%c0_85, %c0_86] : memref<8x128xf32, #tpu.memory_space<vmem>>, vector<8x128xf32>
    tpu.vector_store %arg9[%c0_85, %c0_86], %474 {strides = array<i32>} : memref<8x128xf32, #tpu.memory_space<vmem>>, vector<8x128xf32>,
    return
  }
  func.func @transform_0(%arg0: i32) -> (i32, i32, i32) {
    %c0_i32 = arith.constant 0 : i32
    %c0_i32_0 = arith.constant 0 : i32
    %c0_i32_1 = arith.constant 0 : i32
    return %arg0, %c0_i32, %c0_i32_0 : i32, i32, i32
  }
  func.func @transform_1(%arg0: i32) -> (i32, i32) {
    %c0_i32 = arith.constant 0 : i32
    %c0_i32_0 = arith.constant 0 : i32
    %c0_i32_1 = arith.constant 0 : i32
    return %c0_i32, %c0_i32_0 : i32, i32
  }
  func.func @transform_2(%arg0: i32) -> (i32, i32) {
    %c0_i32 = arith.constant 0 : i32
    %c0_i32_0 = arith.constant 0 : i32
    %c0_i32_1 = arith.constant 0 : i32
    return %c0_i32, %c0_i32_0 : i32, i32
  }
  func.func @transform_3(%arg0: i32) -> (i32, i32) {
    %c0_i32 = arith.constant 0 : i32
    %c0_i32_0 = arith.constant 0 : i32
    %c0_i32_1 = arith.constant 0 : i32
    return %c0_i32, %c0_i32_0 : i32, i32
  }
  func.func @transform_4(%arg0: i32) -> (i32, i32) {
    %c0_i32 = arith.constant 0 : i32
    %c0_i32_0 = arith.constant 0 : i32
    %c0_i32_1 = arith.constant 0 : i32
    return %c0_i32, %c0_i32_0 : i32, i32
  }
  func.func @transform_5(%arg0: i32) -> (i32, i32) {
    %c0_i32 = arith.constant 0 : i32
    %c0_i32_0 = arith.constant 0 : i32
    %c0_i32_1 = arith.constant 0 : i32
    return %c0_i32, %c0_i32_0 : i32, i32
  }
  func.func @transform_6(%arg0: i32) -> (i32, i32) {
    %c0_i32 = arith.constant 0 : i32
    %c0_i32_0 = arith.constant 0 : i32
    %c0_i32_1 = arith.constant 0 : i32
    return %c0_i32, %c0_i32_0 : i32, i32
  }
  func.func @transform_7(%arg0: i32) -> (i32, i32) {
    %c0_i32 = arith.constant 0 : i32
    %c0_i32_0 = arith.constant 0 : i32
    %c0_i32_1 = arith.constant 0 : i32
    return %c0_i32, %c0_i32_0 : i32, i32
  }
  func.func @transform_8(%arg0: i32) -> (i32, i32) {
    %c0_i32 = arith.constant 0 : i32
    %c0_i32_0 = arith.constant 0 : i32
    return %arg0, %c0_i32 : i32, i32
  }
}

</mosaic_0001>

<llo_original>
// kernel: tpu_custom_call.1
$region0: #{tpu_custom_call.1}
  #allocation0 [shape = 'u32[]', space=smem, size = 0x4, offset = 0x4, fixed_abs, tag = 'smem constant byte address 0x4 - core index']
  #allocation1 [shape = 'u32[72,128]{1,0:T(1,128)}', space=vmem, size = 0x9000, scoped, tag = 'internal scratch']
  %s0 = inlined_call_operand.vmem [shape: f32[2,64,8], index: 0, kind: input, shape index: {}]
  %s1 = inlined_call_operand.vmem [shape: f32[8,128], index: 1, kind: input, shape index: {}]
  %s2 = inlined_call_operand.vmem [shape: f32[1,128], index: 2, kind: input, shape index: {}]
  %s3 = inlined_call_operand.vmem [shape: f32[32,128], index: 3, kind: input, shape index: {}]
  %s4 = inlined_call_operand.vmem [shape: f32[64,128], index: 4, kind: input, shape index: {}]
  %s5 = inlined_call_operand.vmem [shape: f32[1,128], index: 5, kind: input, shape index: {}]
  %s6 = inlined_call_operand.vmem [shape: f32[32,128], index: 6, kind: input, shape index: {}]
  %s7 = inlined_call_operand.vmem [shape: f32[1,128], index: 7, kind: input, shape index: {}]
  %s8 = inlined_call_operand.hbm [shape: f32[16,128], index: 8, kind: output, shape index: {}]
  %s9 = sld [smem:[#allocation0]]
  $region65: #{tpu_custom_call.1} parent=0
    _
  %s11 = ssub.s32 1, %s9
  %s12 = scalar_select 0, %s11, %s9
  $region1: #{tpu_custom_call.1} parent=0
    #allocation2 [shape = 'u8[8192]{0}', space=vmem, size = 0x2000, scoped, tag = 'output window, operand 0']
    #allocation3 [shape = 's32[2]{0}', space=sflag, size = 0x8, scoped, tag = 'scoped memory for tpu_custom_call.1']
    %13 = vsyncpa [#allocation3], 0
    %s14 = scalar_lea.sflag [#allocation3], 1
    %15 = vsyncpa %s14, 0
    loop: start=0, step=1, limit=4
    $region2: #{tpu_custom_call.1} parent=1 // loop_pre_header
      _
    $region3: #{tpu_custom_call.1} parent=1 // loop_header
      %s17 = sphi 0, %s21
      %p18 = scmp.ge.s32.totalorder %s17, 4
      %s27 = sphi 0, %s29
      %s30 = sphi 0, %s27
      %s31 = sphi 0, %s30
      %s47 = sphi 0, %s31
      %s51 = sphi 0, %s51
      %s53 = sphi 0, %s51
      %s54 = sphi 0, %s53
      %s68 = sphi 0, %s54
      %s72 = sphi 0, %s72
      %s74 = sphi 0, %s72
      %s75 = sphi 0, %s74
      %s89 = sphi 0, %s75
      %s93 = sphi 0, %s93
      %s95 = sphi 0, %s93
      %s96 = sphi 0, %s95
      %s110 = sphi 0, %s96
      %s114 = sphi 0, %s114
      %s116 = sphi 0, %s114
      %s117 = sphi 0, %s116
      %s131 = sphi 0, %s117
      %s135 = sphi 0, %s135
      %s137 = sphi 0, %s135
      %s138 = sphi 0, %s137
      %s152 = sphi 0, %s138
      %s156 = sphi 0, %s156
      %s158 = sphi 0, %s156
      %s159 = sphi 0, %s158
      %s173 = sphi 0, %s159
      %s177 = sphi 0, %s177
      %s179 = sphi 0, %s177
      %s180 = sphi 0, %s179
      %s194 = sphi 0, %s180
      %s200 = sphi 0, %s202
      %s203 = sphi 0, %s200
      %s204 = sphi 0, %s203
      %s220 = sphi 0, %s204
    $region4: #{tpu_custom_call.1} parent=1 // loop_header_branch
      %20 = sbr.rel (%p18) target = $region8
    $region5: #{tpu_custom_call.1} parent=1 // loop_body
      %s22 = ssub.s32 %s17, 1
      %s23 = ssub.s32 %s17, 2
      %s24 = sadd.s32 %s17, 1
      %s25 = ssub.s32 %s17, %s24
      %p26 = scmp.eq.s32.totalorder %s25, 0
      %s28 = sadd.s32 %s27, 1
      %s29 = scalar_select %p26, %s27, %s28
      %p32 = pneg %p26
      %p33 = scmp.eq.s32.totalorder %s17, 1
      %p34 = por %p32, %p33
      %p35 = scmp.ne.s32.totalorder %s27, %s30
      %p36 = scmp.eq.s32.totalorder %s17, 0
      %p37 = por %p35, %p36
      %p38 = scmp.ne.s32.totalorder %s27, %s30
      %p39 = scmp.eq.s32.totalorder %s22, 1
      %p40 = por %p38, %p39
      %p41 = scmp.ne.s32.totalorder %s30, %s31
      %p42 = scmp.eq.s32.totalorder %s22, 0
      %p43 = por %p41, %p42
      %p44 = scmp.ne.s32.totalorder %s30, %s31
      %p45 = scmp.eq.s32.totalorder %s23, 1
      %p46 = por %p44, %p45
      %p48 = scmp.ne.s32.totalorder %s31, %s47
      %p49 = scmp.eq.s32.totalorder %s23, 0
      %p50 = por %p48, %p49
      %s52 = sadd.s32 %s51, 1
      %p55 = scmp.eq.s32.totalorder %s17, 1
      %p56 = scmp.ne.s32.totalorder %s51, %s53
      %p57 = scmp.eq.s32.totalorder %s17, 0
      %p58 = por %p56, %p57
      %p59 = scmp.ne.s32.totalorder %s51, %s53
      %p60 = scmp.eq.s32.totalorder %s22, 1
      %p61 = por %p59, %p60
      %p62 = scmp.ne.s32.totalorder %s53, %s54
      %p63 = scmp.eq.s32.totalorder %s22, 0
      %p64 = por %p62, %p63
      %p65 = scmp.ne.s32.totalorder %s53, %s54
      %p66 = scmp.eq.s32.totalorder %s23, 1
      %p67 = por %p65, %p66
      %p69 = scmp.ne.s32.totalorder %s54, %s68
      %p70 = scmp.eq.s32.totalorder %s23, 0
      %p71 = por %p69, %p70
      %s73 = sadd.s32 %s72, 1
      %p76 = scmp.eq.s32.totalorder %s17, 1
      %p77 = scmp.ne.s32.totalorder %s72, %s74
      %p78 = scmp.eq.s32.totalorder %s17, 0
      %p79 = por %p77, %p78
      %p80 = scmp.ne.s32.totalorder %s72, %s74
      %p81 = scmp.eq.s32.totalorder %s22, 1
      %p82 = por %p80, %p81
      %p83 = scmp.ne.s32.totalorder %s74, %s75
      %p84 = scmp.eq.s32.totalorder %s22, 0
      %p85 = por %p83, %p84
      %p86 = scmp.ne.s32.totalorder %s74, %s75
      %p87 = scmp.eq.s32.totalorder %s23, 1
      %p88 = por %p86, %p87
      %p90 = scmp.ne.s32.totalorder %s75, %s89
      %p91 = scmp.eq.s32.totalorder %s23, 0
      %p92 = por %p90, %p91
      %s94 = sadd.s32 %s93, 1
      %p97 = scmp.eq.s32.totalorder %s17, 1
      %p98 = scmp.ne.s32.totalorder %s93, %s95
      %p99 = scmp.eq.s32.totalorder %s17, 0
      %p100 = por %p98, %p99
      %p101 = scmp.ne.s32.totalorder %s93, %s95
      %p102 = scmp.eq.s32.totalorder %s22, 1
      %p103 = por %p101, %p102
      %p104 = scmp.ne.s32.totalorder %s95, %s96
      %p105 = scmp.eq.s32.totalorder %s22, 0
      %p106 = por %p104, %p105
      %p107 = scmp.ne.s32.totalorder %s95, %s96
      %p108 = scmp.eq.s32.totalorder %s23, 1
      %p109 = por %p107, %p108
      %p111 = scmp.ne.s32.totalorder %s96, %s110
      %p112 = scmp.eq.s32.totalorder %s23, 0
      %p113 = por %p111, %p112
      %s115 = sadd.s32 %s114, 1
      %p118 = scmp.eq.s32.totalorder %s17, 1
      %p119 = scmp.ne.s32.totalorder %s114, %s116
      %p120 = scmp.eq.s32.totalorder %s17, 0
      %p121 = por %p119, %p120
      %p122 = scmp.ne.s32.totalorder %s114, %s116
      %p123 = scmp.eq.s32.totalorder %s22, 1
      %p124 = por %p122, %p123
      %p125 = scmp.ne.s32.totalorder %s116, %s117
      %p126 = scmp.eq.s32.totalorder %s22, 0
      %p127 = por %p125, %p126
      %p128 = scmp.ne.s32.totalorder %s116, %s117
      %p129 = scmp.eq.s32.totalorder %s23, 1
      %p130 = por %p128, %p129
      %p132 = scmp.ne.s32.totalorder %s117, %s131
      %p133 = scmp.eq.s32.totalorder %s23, 0
      %p134 = por %p132, %p133
      %s136 = sadd.s32 %s135, 1
      %p139 = scmp.eq.s32.totalorder %s17, 1
      %p140 = scmp.ne.s32.totalorder %s135, %s137
      %p141 = scmp.eq.s32.totalorder %s17, 0
      %p142 = por %p140, %p141
      %p143 = scmp.ne.s32.totalorder %s135, %s137
      %p144 = scmp.eq.s32.totalorder %s22, 1
      %p145 = por %p143, %p144
      %p146 = scmp.ne.s32.totalorder %s137, %s138
      %p147 = scmp.eq.s32.totalorder %s22, 0
      %p148 = por %p146, %p147
      %p149 = scmp.ne.s32.totalorder %s137, %s138
      %p150 = scmp.eq.s32.totalorder %s23, 1
      %p151 = por %p149, %p150
      %p153 = scmp.ne.s32.totalorder %s138, %s152
      %p154 = scmp.eq.s32.totalorder %s23, 0
      %p155 = por %p153, %p154
      %s157 = sadd.s32 %s156, 1
      %p160 = scmp.eq.s32.totalorder %s17, 1
      %p161 = scmp.ne.s32.totalorder %s156, %s158
      %p162 = scmp.eq.s32.totalorder %s17, 0
      %p163 = por %p161, %p162
      %p164 = scmp.ne.s32.totalorder %s156, %s158
      %p165 = scmp.eq.s32.totalorder %s22, 1
      %p166 = por %p164, %p165
      %p167 = scmp.ne.s32.totalorder %s158, %s159
      %p168 = scmp.eq.s32.totalorder %s22, 0
      %p169 = por %p167, %p168
      %p170 = scmp.ne.s32.totalorder %s158, %s159
      %p171 = scmp.eq.s32.totalorder %s23, 1
      %p172 = por %p170, %p171
      %p174 = scmp.ne.s32.totalorder %s159, %s173
      %p175 = scmp.eq.s32.totalorder %s23, 0
      %p176 = por %p174, %p175
      %s178 = sadd.s32 %s177, 1
      %p181 = scmp.eq.s32.totalorder %s17, 1
      %p182 = scmp.ne.s32.totalorder %s177, %s179
      %p183 = scmp.eq.s32.totalorder %s17, 0
      %p184 = por %p182, %p183
      %p185 = scmp.ne.s32.totalorder %s177, %s179
      %p186 = scmp.eq.s32.totalorder %s22, 1
      %p187 = por %p185, %p186
      %p188 = scmp.ne.s32.totalorder %s179, %s180
      %p189 = scmp.eq.s32.totalorder %s22, 0
      %p190 = por %p188, %p189
      %p191 = scmp.ne.s32.totalorder %s179, %s180
      %p192 = scmp.eq.s32.totalorder %s23, 1
      %p193 = por %p191, %p192
      %p195 = scmp.ne.s32.totalorder %s180, %s194
      %p196 = scmp.eq.s32.totalorder %s23, 0
      %p197 = por %p195, %p196
      %s198 = ssub.s32 %s17, %s24
      %p199 = scmp.eq.s32.totalorder %s198, 0
      %s201 = sadd.s32 %s200, 1
      %s202 = scalar_select %p199, %s200, %s201
      %p205 = pneg %p199
      %p206 = scmp.eq.s32.totalorder %s17, 1
      %p207 = por %p205, %p206
      %p208 = scmp.ne.s32.totalorder %s200, %s203
      %p209 = scmp.eq.s32.totalorder %s17, 0
      %p210 = por %p208, %p209
      %p211 = scmp.ne.s32.totalorder %s200, %s203
      %p212 = scmp.eq.s32.totalorder %s22, 1
      %p213 = por %p211, %p212
      %p214 = scmp.ne.s32.totalorder %s203, %s204
      %p215 = scmp.eq.s32.totalorder %s22, 0
      %p216 = por %p214, %p215
      %p217 = scmp.ne.s32.totalorder %s203, %s204
      %p218 = scmp.eq.s32.totalorder %s23, 1
      %p219 = por %p217, %p218
      %p221 = scmp.ne.s32.totalorder %s204, %s220
      %p222 = scmp.eq.s32.totalorder %s23, 0
      %p223 = por %p221, %p222
      %p224 = scmp.le.s32.totalorder 1, %s17
      %p225 = scmp.lt.s32.totalorder %s17, 3
      %p226 = pnand %p224, %p225
      %p227 = pneg %p226
      // Predicated region
      $region9: #{tpu_custom_call.1} parent=5 // pred_check
        _
      $region10: #{tpu_custom_call.1} parent=5 // pred_check_branch
        %229 = sbr.rel (%p226) target = $region12
      $region11: #{tpu_custom_call.1} parent=5 // pred_region
        %s230 = ssub.s32 %s17, 1
        // Predicated region
        $region13: #{tpu_custom_call.1} parent=11 // pred_check
          %p231 = pneg %p64
        $region14: #{tpu_custom_call.1} parent=11 // pred_check_branch
          %233 = sbr.rel (%p231) target = $region16
        $region15: #{tpu_custom_call.1} parent=11 // pred_region
          _
        $region16: #{tpu_custom_call.1} parent=11 // pred_fallthru
          _
        // Predicated region
        $region17: #{tpu_custom_call.1} parent=11 // pred_check
          %p234 = pneg %p85
        $region18: #{tpu_custom_call.1} parent=11 // pred_check_branch
          %236 = sbr.rel (%p234) target = $region20
        $region19: #{tpu_custom_call.1} parent=11 // pred_region
          _
        $region20: #{tpu_custom_call.1} parent=11 // pred_fallthru
          _
        // Predicated region
        $region21: #{tpu_custom_call.1} parent=11 // pred_check
          %p237 = pneg %p106
        $region22: #{tpu_custom_call.1} parent=11 // pred_check_branch
          %239 = sbr.rel (%p237) target = $region24
        $region23: #{tpu_custom_call.1} parent=11 // pred_region
          _
        $region24: #{tpu_custom_call.1} parent=11 // pred_fallthru
          _
        // Predicated region
        $region25: #{tpu_custom_call.1} parent=11 // pred_check
          %p240 = pneg %p127
        $region26: #{tpu_custom_call.1} parent=11 // pred_check_branch
          %242 = sbr.rel (%p240) target = $region28
        $region27: #{tpu_custom_call.1} parent=11 // pred_region
          _
        $region28: #{tpu_custom_call.1} parent=11 // pred_fallthru
          _
        // Predicated region
        $region29: #{tpu_custom_call.1} parent=11 // pred_check
          %p243 = pneg %p148
        $region30: #{tpu_custom_call.1} parent=11 // pred_check_branch
          %245 = sbr.rel (%p243) target = $region32
        $region31: #{tpu_custom_call.1} parent=11 // pred_region
          _
        $region32: #{tpu_custom_call.1} parent=11 // pred_fallthru
          _
        // Predicated region
        $region33: #{tpu_custom_call.1} parent=11 // pred_check
          %p246 = pneg %p169
        $region34: #{tpu_custom_call.1} parent=11 // pred_check_branch
          %248 = sbr.rel (%p246) target = $region36
        $region35: #{tpu_custom_call.1} parent=11 // pred_region
          _
        $region36: #{tpu_custom_call.1} parent=11 // pred_fallthru
          _
        // Predicated region
        $region37: #{tpu_custom_call.1} parent=11 // pred_check
          %p249 = pneg %p190
        $region38: #{tpu_custom_call.1} parent=11 // pred_check_branch
          %251 = sbr.rel (%p249) target = $region40
        $region39: #{tpu_custom_call.1} parent=11 // pred_region
          _
        $region40: #{tpu_custom_call.1} parent=11 // pred_fallthru
          _
      $region12: #{tpu_custom_call.1} parent=5 // pred_fallthru
        _
      %p252 = scmp.lt.s32.totalorder %s17, 2
      // Predicated region
      $region41: #{tpu_custom_call.1} parent=5 // pred_check
        %p253 = pneg %p252
      $region42: #{tpu_custom_call.1} parent=5 // pred_check_branch
        %255 = sbr.rel (%p253) target = $region44
      $region43: #{tpu_custom_call.1} parent=5 // pred_region
        // Predicated region
        $region45: #{tpu_custom_call.1} parent=43 // pred_check
          %p256 = pneg %p37
        $region46: #{tpu_custom_call.1} parent=43 // pred_check_branch
          %258 = sbr.rel (%p256) target = $region48
        $region47: #{tpu_custom_call.1} parent=43 // pred_region
          %p259 = scmp.lt.s32.totalorder %s17, 1
          %s260 = scalar_select %p259, %s17, 1
          %s261 = smul.addr %s260, 8
          %s262 = smul.addr %s261, 8
          %s263 = scalar_lea.vmem %s0, %s262
        $region48: #{tpu_custom_call.1} parent=43 // pred_fallthru
          _
      $region44: #{tpu_custom_call.1} parent=5 // pred_fallthru
        _
      %p264 = scmp.le.s32.totalorder 1, %s17
      %p265 = scmp.lt.s32.totalorder %s17, 3
      %p266 = pnand %p264, %p265
      %p267 = pneg %p266
      // Predicated region
      $region49: #{tpu_custom_call.1} parent=5 // pred_check
        _
      $region50: #{tpu_custom_call.1} parent=5 // pred_check_branch
        %269 = sbr.rel (%p266) target = $region52
      $region51: #{tpu_custom_call.1} parent=5 // pred_region
        %s270 = ssub.s32 %s17, 1
        %p271 = scmp.lt.s32.totalorder %s22, 1
        %s272 = scalar_select %p271, %s22, 1
        %s273 = smul.addr %s272, 8
        %s274 = smul.addr %s273, 8
        %s275 = scalar_lea.vmem %s0, %s274
        %p276 = pneg %p43
        %p277 = pneg %p40
        %p278 = pneg %p64
        %p279 = pneg %p61
        %p280 = pneg %p85
        %p281 = pneg %p82
        %p282 = pneg %p106
        %p283 = pneg %p103
        %p284 = pneg %p127
        %p285 = pneg %p124
        %p286 = pneg %p148
        %p287 = pneg %p145
        %p288 = pneg %p169
        %p289 = pneg %p166
        %p290 = pneg %p190
        %p291 = pneg %p187
        %p292 = pneg %p216
        %p293 = pneg %p213
        %s294 = sand.u32 %s203, 1
        %s295 = scalar_lea.sflag [#allocation3], %s294
        %s296 = sand.u32 %s203, 1
        %s297 = smul.addr %s296, 8
        %s298 = scalar_lea.vmem [#allocation2], %s297
        %p299 = scmp.lt.s32.totalorder %s22, 1
        %s300 = scalar_select %p299, %s22, 1
        %s301 = smul.addr %s300, 8
        %s302 = smul.addr %s301, 8
        %s303 = scalar_lea.vmem %s0, %s302
        %v304 = vld [vmem:[%s303] sm:$0xff]
        %v305 = vld [vmem:[%s303 + $0x8] sm:$0xff]
        %v306 = vld [vmem:[%s303 + $0x10] sm:$0xff]
        %v307 = vld [vmem:[%s303 + $0x18] sm:$0xff]
        %v308 = vld [vmem:[%s303 + $0x20] sm:$0xff]
        %v309 = vld [vmem:[%s303 + $0x28] sm:$0xff]
        %v310 = vld [vmem:[%s303 + $0x30] sm:$0xff]
        %v311 = vld [vmem:[%s303 + $0x38] sm:$0xff]
        %v312 = vld [vmem:[%s1] sm:$0xff]
        %v313 = vld [vmem:[%s2] sm:$0x1]
        %v315 = vperm.slane %v313, 0
        %vm317 = vcmask 64512
        %v319 = vsel %vm317, %v304, 0
        %v322 = vsel %vm317, %v305, 0
        %v325 = vsel %vm317, %v306, 0
        %v328 = vsel %vm317, %v307, 0
        %v331 = vsel %vm317, %v308, 0
        %v334 = vsel %vm317, %v309, 0
        %v337 = vsel %vm317, %v310, 0
        %v340 = vsel %vm317, %v311, 0
        %342 = vmatpush.msra.mxu0 0.0
        %343 = vmatpush.msra.mxu0 0.0
        %344 = vmatpush.msra.mxu0 0.0
        %345 = vmatpush.msra.mxu0 0.0
        %346 = vmatpush.msra.mxu0 0.0
        %347 = vmatpush.msra.mxu0 0.0
        %348 = vmatpush.msra.mxu0 0.0
        %349 = vmatpush.msra.mxu0 0.0
        %350 = vmatpush.msra.mxu0 0.0
        %351 = vmatpush.msra.mxu0 0.0
        %352 = vmatpush.msra.mxu0 0.0
        %353 = vmatpush.msra.mxu0 0.0
        %354 = vmatpush.msra.mxu0 0.0
        %355 = vmatpush.msra.mxu0 0.0
        %356 = vmatpush.msra.mxu0 0.0
        %357 = vmatpush.msra.mxu0 %v312
        %358 = vmatmul.f32.gmra.mxu0 %v319
        %v359 = vpop.f32.mrf.mxu0
        %v360 = vadd.f32 %v315, %v359
        %361 = vmatmul.f32.gmra.mxu0 %v322
        %v362 = vpop.f32.mrf.mxu0
        %v363 = vadd.f32 %v315, %v362
        %364 = vmatmul.f32.gmra.mxu0 %v325
        %v365 = vpop.f32.mrf.mxu0
        %v366 = vadd.f32 %v315, %v365
        %367 = vmatmul.f32.gmra.mxu0 %v328
        %v368 = vpop.f32.mrf.mxu0
        %v369 = vadd.f32 %v315, %v368
        %370 = vmatmul.f32.gmra.mxu0 %v331
        %v371 = vpop.f32.mrf.mxu0
        %v372 = vadd.f32 %v315, %v371
        %373 = vmatmul.f32.gmra.mxu0 %v334
        %v374 = vpop.f32.mrf.mxu0
        %v375 = vadd.f32 %v315, %v374
        %376 = vmatmul.f32.gmra.mxu0 %v337
        %v377 = vpop.f32.mrf.mxu0
        %v378 = vadd.f32 %v315, %v377
        %379 = vmatmul.f32.gmra.mxu0 %v340
        %v380 = vpop.f32.mrf.mxu0
        %v381 = vadd.f32 %v315, %v380
        %382 = vdwg.mxu0
        %v383 = vld [vmem:[%s3] sm:$0xff]
        %v384 = vld [vmem:[%s3 + $0x8] sm:$0xff]
        %v385 = vld [vmem:[%s3 + $0x10] sm:$0xff]
        %v386 = vld [vmem:[%s3 + $0x18] sm:$0xff]
        %v387 = vld [vmem:[%s4] sm:$0xff]
        %v388 = vld [vmem:[%s4 + $0x8] sm:$0xff]
        %v389 = vld [vmem:[%s4 + $0x10] sm:$0xff]
        %v390 = vld [vmem:[%s4 + $0x18] sm:$0xff]
        %v391 = vld [vmem:[%s4 + $0x20] sm:$0xff]
        %v392 = vld [vmem:[%s4 + $0x28] sm:$0xff]
        %v393 = vld [vmem:[%s4 + $0x30] sm:$0xff]
        %v394 = vld [vmem:[%s4 + $0x38] sm:$0xff]
        %v395 = vld [vmem:[%s5] sm:$0x1]
        %vm396 = vcmask 261120
        %v398 = vsel %vm396, 0.0, 0
        %400 = vmatpush.msra.mxu0 0.0
        %401 = vmatpush.msra.mxu0 0.0
        %402 = vmatpush.msra.mxu0 0.0
        %403 = vmatpush.msra.mxu0 0.0
        %404 = vmatpush.msra.mxu0 0.0
        %405 = vmatpush.msra.mxu0 0.0
        %406 = vmatpush.msra.mxu0 0.0
        %407 = vmatpush.msra.mxu0 0.0
        %408 = vmatpush.msra.mxu0 0.0
        %409 = vmatpush.msra.mxu0 0.0
        %410 = vmatpush.msra.mxu0 0.0
        %411 = vmatpush.msra.mxu0 0.0
        %412 = vmatpush.msra.mxu0 %v386
        %413 = vmatpush.msra.mxu0 %v385
        %414 = vmatpush.msra.mxu0 %v384
        %415 = vmatpush.msra.mxu0 %v383
        %416 = vmatmul.f32.gmra.mxu0 %v398
        %v417 = vpop.f32.mrf.mxu0
        %v418 = vadd.f32 0.0, %v417
        %419 = vdwg.mxu0
        %v420 = vadd.f32 %v360, %v418
        %v421 = vxor.u32 %v420, 2147483648
        %v422 = vmul.f32 %v421, 1.442695
        %v423 = vpow.pop %v422
        %v424 = vadd.f32 %v423, 1.0
        %v425 = vrcp.pop %v424
        %v426 = vmul.f32 %v424, %v425
        %v427 = vsub.f32 1.0, %v426
        %v428 = vmul.f32 %v425, %v427
        %v429 = vadd.f32 %v425, %v428
        %vm430 = vweird.f32 %v424
        %vm431 = vweird.f32 %v425
        %vm432 = vmor %vm430, %vm431
        %v433 = vsel %vm432, %v425, %v429
        %v434 = vand.u32 2147483647, %v424
        %vm435 = vcmp.eq.f32.partialorder %v434, 8.507059e+37
        %v436 = vand.u32 %v424, 2147483648
        %v437 = vor.u32 1.1754944e-38, %v436
        %v438 = vsel %vm435, %v437, %v433
        %v439 = vmul.f32 1.0, %v438
        %v440 = vtanh.pop %v420
        %v441 = vmul.f32 %v439, 0.0
        %443 = vrot.lane.b32.xlu0 %v440, 64
        %v444 = vpop.permute.xlu0 %443
        %v446 = vmul.f32 %v439, %v444
        %448 = vrot.lane.b32.xlu0 %v446, 32
        %v449 = vpop.permute.xlu0 %448
        %v451 = vadd.f32 %v441, %v449
        %v452 = vtanh.pop %v451
        %454 = vrot.lane.b32.xlu0 %v452, 64
        %v455 = vpop.permute.xlu0 %454
        %v457 = vmul.f32 %v439, %v455
        %459 = vrot.lane.b32.xlu0 %v457, 32
        %v460 = vpop.permute.xlu0 %459
        %v462 = vsel %vm396, %v460, 0.0
        %v464 = vperm.slane %v395, 0
        %vm466 = vcmask 523264
        %v468 = vsel %vm466, %v462, 0
        %470 = vmatpush.msra.mxu0 0.0
        %471 = vmatpush.msra.mxu0 0.0
        %472 = vmatpush.msra.mxu0 0.0
        %473 = vmatpush.msra.mxu0 0.0
        %474 = vmatpush.msra.mxu0 0.0
        %475 = vmatpush.msra.mxu0 0.0
        %476 = vmatpush.msra.mxu0 0.0
        %477 = vmatpush.msra.mxu0 0.0
        %478 = vmatpush.msra.mxu0 %v394
        %479 = vmatpush.msra.mxu0 %v393
        %480 = vmatpush.msra.mxu0 %v392
        %481 = vmatpush.msra.mxu0 %v391
        %482 = vmatpush.msra.mxu0 %v390
        %483 = vmatpush.msra.mxu0 %v389
        %484 = vmatpush.msra.mxu0 %v388
        %485 = vmatpush.msra.mxu0 %v387
        %486 = vmatmul.f32.gmra.mxu0 %v468
        %v487 = vpop.f32.mrf.mxu0
        %v488 = vadd.f32 %v464, %v487
        %489 = vdwg.mxu0
        %v490 = vxor.u32 %v488, 2147483648
        %v491 = vmul.f32 %v490, 1.442695
        %v492 = vpow.pop %v491
        %v493 = vadd.f32 %v492, 1.0
        %v494 = vrcp.pop %v493
        %v495 = vmul.f32 %v493, %v494
        %v496 = vsub.f32 1.0, %v495
        %v497 = vmul.f32 %v494, %v496
        %v498 = vadd.f32 %v494, %v497
        %vm499 = vweird.f32 %v493
        %vm500 = vweird.f32 %v494
        %vm501 = vmor %vm499, %vm500
        %v502 = vsel %vm501, %v494, %v498
        %v503 = vand.u32 2147483647, %v493
        %vm504 = vcmp.eq.f32.partialorder %v503, 8.507059e+37
        %v505 = vand.u32 %v493, 2147483648
        %v506 = vor.u32 1.1754944e-38, %v505
        %v507 = vsel %vm504, %v506, %v502
        %v508 = vmul.f32 1.0, %v507
        %v509 = vtanh.pop %v488
        %v510 = vmul.f32 %v508, 0.0
        %512 = vrot.lane.b32.xlu0 %v509, 64
        %v513 = vpop.permute.xlu0 %512
        %v515 = vmul.f32 %v508, %v513
        %517 = vrot.lane.b32.xlu0 %v515, 32
        %v518 = vpop.permute.xlu0 %517
        %v520 = vadd.f32 %v510, %v518
        %v521 = vtanh.pop %v520
        %523 = vrot.lane.b32.xlu0 %v521, 64
        %v524 = vpop.permute.xlu0 %523
        %v526 = vmul.f32 %v508, %v524
        %v527 = vsel %vm396, %v460, 0
        %529 = vmatpush.msra.mxu0 0.0
        %530 = vmatpush.msra.mxu0 0.0
        %531 = vmatpush.msra.mxu0 0.0
        %532 = vmatpush.msra.mxu0 0.0
        %533 = vmatpush.msra.mxu0 0.0
        %534 = vmatpush.msra.mxu0 0.0
        %535 = vmatpush.msra.mxu0 0.0
        %536 = vmatpush.msra.mxu0 0.0
        %537 = vmatpush.msra.mxu0 0.0
        %538 = vmatpush.msra.mxu0 0.0
        %539 = vmatpush.msra.mxu0 0.0
        %540 = vmatpush.msra.mxu0 0.0
        %541 = vmatpush.msra.mxu0 %v386
        %542 = vmatpush.msra.mxu0 %v385
        %543 = vmatpush.msra.mxu0 %v384
        %544 = vmatpush.msra.mxu0 %v383
        %545 = vmatmul.f32.gmra.mxu0 %v527
        %v546 = vpop.f32.mrf.mxu0
        %v547 = vadd.f32 0.0, %v546
        %548 = vdwg.mxu0
        %v549 = vadd.f32 %v363, %v547
        %v550 = vxor.u32 %v549, 2147483648
        %v551 = vmul.f32 %v550, 1.442695
        %v552 = vpow.pop %v551
        %v553 = vadd.f32 %v552, 1.0
        %v554 = vrcp.pop %v553
        %v555 = vmul.f32 %v553, %v554
        %v556 = vsub.f32 1.0, %v555
        %v557 = vmul.f32 %v554, %v556
        %v558 = vadd.f32 %v554, %v557
        %vm559 = vweird.f32 %v553
        %vm560 = vweird.f32 %v554
        %vm561 = vmor %vm559, %vm560
        %v562 = vsel %vm561, %v554, %v558
        %v563 = vand.u32 2147483647, %v553
        %vm564 = vcmp.eq.f32.partialorder %v563, 8.507059e+37
        %v565 = vand.u32 %v553, 2147483648
        %v566 = vor.u32 1.1754944e-38, %v565
        %v567 = vsel %vm564, %v566, %v562
        %v568 = vmul.f32 1.0, %v567
        %v569 = vtanh.pop %v549
        %v570 = vmul.f32 %v568, %v451
        %572 = vrot.lane.b32.xlu0 %v569, 64
        %v573 = vpop.permute.xlu0 %572
        %v575 = vmul.f32 %v568, %v573
        %577 = vrot.lane.b32.xlu0 %v575, 32
        %v578 = vpop.permute.xlu0 %577
        %v580 = vadd.f32 %v570, %v578
        %v581 = vtanh.pop %v580
        %583 = vrot.lane.b32.xlu0 %v581, 64
        %v584 = vpop.permute.xlu0 %583
        %v586 = vmul.f32 %v568, %v584
        %588 = vrot.lane.b32.xlu0 %v586, 32
        %v589 = vpop.permute.xlu0 %588
        %592 = vrot.lane.b32.xlu0 %v526, 64
        %v593 = vpop.permute.xlu0 %592
        %v595 = vsel %vm396, %v589, %v593
        %v597 = vsel %vm466, %v595, 0
        %599 = vmatpush.msra.mxu0 0.0
        %600 = vmatpush.msra.mxu0 0.0
        %601 = vmatpush.msra.mxu0 0.0
        %602 = vmatpush.msra.mxu0 0.0
        %603 = vmatpush.msra.mxu0 0.0
        %604 = vmatpush.msra.mxu0 0.0
        %605 = vmatpush.msra.mxu0 0.0
        %606 = vmatpush.msra.mxu0 0.0
        %607 = vmatpush.msra.mxu0 %v394
        %608 = vmatpush.msra.mxu0 %v393
        %609 = vmatpush.msra.mxu0 %v392
        %610 = vmatpush.msra.mxu0 %v391
        %611 = vmatpush.msra.mxu0 %v390
        %612 = vmatpush.msra.mxu0 %v389
        %613 = vmatpush.msra.mxu0 %v388
        %614 = vmatpush.msra.mxu0 %v387
        %615 = vmatmul.f32.gmra.mxu0 %v597
        %v616 = vpop.f32.mrf.mxu0
        %v617 = vadd.f32 %v464, %v616
        %618 = vdwg.mxu0
        %v619 = vxor.u32 %v617, 2147483648
        %v620 = vmul.f32 %v619, 1.442695
        %v621 = vpow.pop %v620
        %v622 = vadd.f32 %v621, 1.0
        %v623 = vrcp.pop %v622
        %v624 = vmul.f32 %v622, %v623
        %v625 = vsub.f32 1.0, %v624
        %v626 = vmul.f32 %v623, %v625
        %v627 = vadd.f32 %v623, %v626
        %vm628 = vweird.f32 %v622
        %vm629 = vweird.f32 %v623
        %vm630 = vmor %vm628, %vm629
        %v631 = vsel %vm630, %v623, %v627
        %v632 = vand.u32 2147483647, %v622
        %vm633 = vcmp.eq.f32.partialorder %v632, 8.507059e+37
        %v634 = vand.u32 %v622, 2147483648
        %v635 = vor.u32 1.1754944e-38, %v634
        %v636 = vsel %vm633, %v635, %v631
        %v637 = vmul.f32 1.0, %v636
        %v638 = vtanh.pop %v617
        %v639 = vmul.f32 %v637, %v520
        %641 = vrot.lane.b32.xlu0 %v638, 64
        %v642 = vpop.permute.xlu0 %641
        %v644 = vmul.f32 %v637, %v642
        %646 = vrot.lane.b32.xlu0 %v644, 32
        %v647 = vpop.permute.xlu0 %646
        %v649 = vadd.f32 %v639, %v647
        %v650 = vtanh.pop %v649
        %652 = vrot.lane.b32.xlu0 %v650, 64
        %v653 = vpop.permute.xlu0 %652
        %v655 = vmul.f32 %v637, %v653
        %v656 = vsel %vm396, %v589, 0
        %658 = vmatpush.msra.mxu0 0.0
        %659 = vmatpush.msra.mxu0 0.0
        %660 = vmatpush.msra.mxu0 0.0
        %661 = vmatpush.msra.mxu0 0.0
        %662 = vmatpush.msra.mxu0 0.0
        %663 = vmatpush.msra.mxu0 0.0
        %664 = vmatpush.msra.mxu0 0.0
        %665 = vmatpush.msra.mxu0 0.0
        %666 = vmatpush.msra.mxu0 0.0
        %667 = vmatpush.msra.mxu0 0.0
        %668 = vmatpush.msra.mxu0 0.0
        %669 = vmatpush.msra.mxu0 0.0
        %670 = vmatpush.msra.mxu0 %v386
        %671 = vmatpush.msra.mxu0 %v385
        %672 = vmatpush.msra.mxu0 %v384
        %673 = vmatpush.msra.mxu0 %v383
        %674 = vmatmul.f32.gmra.mxu0 %v656
        %v675 = vpop.f32.mrf.mxu0
        %v676 = vadd.f32 0.0, %v675
        %677 = vdwg.mxu0
        %v678 = vadd.f32 %v366, %v676
        %v679 = vxor.u32 %v678, 2147483648
        %v680 = vmul.f32 %v679, 1.442695
        %v681 = vpow.pop %v680
        %v682 = vadd.f32 %v681, 1.0
        %v683 = vrcp.pop %v682
        %v684 = vmul.f32 %v682, %v683
        %v685 = vsub.f32 1.0, %v684
        %v686 = vmul.f32 %v683, %v685
        %v687 = vadd.f32 %v683, %v686
        %vm688 = vweird.f32 %v682
        %vm689 = vweird.f32 %v683
        %vm690 = vmor %vm688, %vm689
        %v691 = vsel %vm690, %v683, %v687
        %v692 = vand.u32 2147483647, %v682
        %vm693 = vcmp.eq.f32.partialorder %v692, 8.507059e+37
        %v694 = vand.u32 %v682, 2147483648
        %v695 = vor.u32 1.1754944e-38, %v694
        %v696 = vsel %vm693, %v695, %v691
        %v697 = vmul.f32 1.0, %v696
        %v698 = vtanh.pop %v678
        %v699 = vmul.f32 %v697, %v580
        %701 = vrot.lane.b32.xlu0 %v698, 64
        %v702 = vpop.permute.xlu0 %701
        %v704 = vmul.f32 %v697, %v702
        %706 = vrot.lane.b32.xlu0 %v704, 32
        %v707 = vpop.permute.xlu0 %706
        %v709 = vadd.f32 %v699, %v707
        %v710 = vtanh.pop %v709
        %712 = vrot.lane.b32.xlu0 %v710, 64
        %v713 = vpop.permute.xlu0 %712
        %v715 = vmul.f32 %v697, %v713
        %717 = vrot.lane.b32.xlu0 %v715, 32
        %v718 = vpop.permute.xlu0 %717
        %721 = vrot.lane.b32.xlu0 %v655, 64
        %v722 = vpop.permute.xlu0 %721
        %v724 = vsel %vm396, %v718, %v722
        %v726 = vsel %vm466, %v724, 0
        %728 = vmatpush.msra.mxu0 0.0
        %729 = vmatpush.msra.mxu0 0.0
        %730 = vmatpush.msra.mxu0 0.0
        %731 = vmatpush.msra.mxu0 0.0
        %732 = vmatpush.msra.mxu0 0.0
        %733 = vmatpush.msra.mxu0 0.0
        %734 = vmatpush.msra.mxu0 0.0
        %735 = vmatpush.msra.mxu0 0.0
        %736 = vmatpush.msra.mxu0 %v394
        %737 = vmatpush.msra.mxu0 %v393
        %738 = vmatpush.msra.mxu0 %v392
        %739 = vmatpush.msra.mxu0 %v391
        %740 = vmatpush.msra.mxu0 %v390
        %741 = vmatpush.msra.mxu0 %v389
        %742 = vmatpush.msra.mxu0 %v388
        %743 = vmatpush.msra.mxu0 %v387
        %744 = vmatmul.f32.gmra.mxu0 %v726
        %v745 = vpop.f32.mrf.mxu0
        %v746 = vadd.f32 %v464, %v745
        %747 = vdwg.mxu0
        %v748 = vxor.u32 %v746, 2147483648
        %v749 = vmul.f32 %v748, 1.442695
        %v750 = vpow.pop %v749
        %v751 = vadd.f32 %v750, 1.0
        %v752 = vrcp.pop %v751
        %v753 = vmul.f32 %v751, %v752
        %v754 = vsub.f32 1.0, %v753
        %v755 = vmul.f32 %v752, %v754
        %v756 = vadd.f32 %v752, %v755
        %vm757 = vweird.f32 %v751
        %vm758 = vweird.f32 %v752
        %vm759 = vmor %vm757, %vm758
        %v760 = vsel %vm759, %v752, %v756
        %v761 = vand.u32 2147483647, %v751
        %vm762 = vcmp.eq.f32.partialorder %v761, 8.507059e+37
        %v763 = vand.u32 %v751, 2147483648
        %v764 = vor.u32 1.1754944e-38, %v763
        %v765 = vsel %vm762, %v764, %v760
        %v766 = vmul.f32 1.0, %v765
        %v767 = vtanh.pop %v746
        %v768 = vmul.f32 %v766, %v649
        %770 = vrot.lane.b32.xlu0 %v767, 64
        %v771 = vpop.permute.xlu0 %770
        %v773 = vmul.f32 %v766, %v771
        %775 = vrot.lane.b32.xlu0 %v773, 32
        %v776 = vpop.permute.xlu0 %775
        %v778 = vadd.f32 %v768, %v776
        %v779 = vtanh.pop %v778
        %781 = vrot.lane.b32.xlu0 %v779, 64
        %v782 = vpop.permute.xlu0 %781
        %v784 = vmul.f32 %v766, %v782
        %v785 = vsel %vm396, %v718, 0
        %787 = vmatpush.msra.mxu0 0.0
        %788 = vmatpush.msra.mxu0 0.0
        %789 = vmatpush.msra.mxu0 0.0
        %790 = vmatpush.msra.mxu0 0.0
        %791 = vmatpush.msra.mxu0 0.0
        %792 = vmatpush.msra.mxu0 0.0
        %793 = vmatpush.msra.mxu0 0.0
        %794 = vmatpush.msra.mxu0 0.0
        %795 = vmatpush.msra.mxu0 0.0
        %796 = vmatpush.msra.mxu0 0.0
        %797 = vmatpush.msra.mxu0 0.0
        %798 = vmatpush.msra.mxu0 0.0
        %799 = vmatpush.msra.mxu0 %v386
        %800 = vmatpush.msra.mxu0 %v385
        %801 = vmatpush.msra.mxu0 %v384
        %802 = vmatpush.msra.mxu0 %v383
        %803 = vmatmul.f32.gmra.mxu0 %v785
        %v804 = vpop.f32.mrf.mxu0
        %v805 = vadd.f32 0.0, %v804
        %806 = vdwg.mxu0
        %v807 = vadd.f32 %v369, %v805
        %v808 = vxor.u32 %v807, 2147483648
        %v809 = vmul.f32 %v808, 1.442695
        %v810 = vpow.pop %v809
        %v811 = vadd.f32 %v810, 1.0
        %v812 = vrcp.pop %v811
        %v813 = vmul.f32 %v811, %v812
        %v814 = vsub.f32 1.0, %v813
        %v815 = vmul.f32 %v812, %v814
        %v816 = vadd.f32 %v812, %v815
        %vm817 = vweird.f32 %v811
        %vm818 = vweird.f32 %v812
        %vm819 = vmor %vm817, %vm818
        %v820 = vsel %vm819, %v812, %v816
        %v821 = vand.u32 2147483647, %v811
        %vm822 = vcmp.eq.f32.partialorder %v821, 8.507059e+37
        %v823 = vand.u32 %v811, 2147483648
        %v824 = vor.u32 1.1754944e-38, %v823
        %v825 = vsel %vm822, %v824, %v820
        %v826 = vmul.f32 1.0, %v825
        %v827 = vtanh.pop %v807
        %v828 = vmul.f32 %v826, %v709
        %830 = vrot.lane.b32.xlu0 %v827, 64
        %v831 = vpop.permute.xlu0 %830
        %v833 = vmul.f32 %v826, %v831
        %835 = vrot.lane.b32.xlu0 %v833, 32
        %v836 = vpop.permute.xlu0 %835
        %v838 = vadd.f32 %v828, %v836
        %v839 = vtanh.pop %v838
        %841 = vrot.lane.b32.xlu0 %v839, 64
        %v842 = vpop.permute.xlu0 %841
        %v844 = vmul.f32 %v826, %v842
        %846 = vrot.lane.b32.xlu0 %v844, 32
        %v847 = vpop.permute.xlu0 %846
        %850 = vrot.lane.b32.xlu0 %v784, 64
        %v851 = vpop.permute.xlu0 %850
        %v853 = vsel %vm396, %v847, %v851
        %v855 = vsel %vm466, %v853, 0
        %857 = vmatpush.msra.mxu0 0.0
        %858 = vmatpush.msra.mxu0 0.0
        %859 = vmatpush.msra.mxu0 0.0
        %860 = vmatpush.msra.mxu0 0.0
        %861 = vmatpush.msra.mxu0 0.0
        %862 = vmatpush.msra.mxu0 0.0
        %863 = vmatpush.msra.mxu0 0.0
        %864 = vmatpush.msra.mxu0 0.0
        %865 = vmatpush.msra.mxu0 %v394
        %866 = vmatpush.msra.mxu0 %v393
        %867 = vmatpush.msra.mxu0 %v392
        %868 = vmatpush.msra.mxu0 %v391
        %869 = vmatpush.msra.mxu0 %v390
        %870 = vmatpush.msra.mxu0 %v389
        %871 = vmatpush.msra.mxu0 %v388
        %872 = vmatpush.msra.mxu0 %v387
        %873 = vmatmul.f32.gmra.mxu0 %v855
        %v874 = vpop.f32.mrf.mxu0
        %v875 = vadd.f32 %v464, %v874
        %876 = vdwg.mxu0
        %v877 = vxor.u32 %v875, 2147483648
        %v878 = vmul.f32 %v877, 1.442695
        %v879 = vpow.pop %v878
        %v880 = vadd.f32 %v879, 1.0
        %v881 = vrcp.pop %v880
        %v882 = vmul.f32 %v880, %v881
        %v883 = vsub.f32 1.0, %v882
        %v884 = vmul.f32 %v881, %v883
        %v885 = vadd.f32 %v881, %v884
        %vm886 = vweird.f32 %v880
        %vm887 = vweird.f32 %v881
        %vm888 = vmor %vm886, %vm887
        %v889 = vsel %vm888, %v881, %v885
        %v890 = vand.u32 2147483647, %v880
        %vm891 = vcmp.eq.f32.partialorder %v890, 8.507059e+37
        %v892 = vand.u32 %v880, 2147483648
        %v893 = vor.u32 1.1754944e-38, %v892
        %v894 = vsel %vm891, %v893, %v889
        %v895 = vmul.f32 1.0, %v894
        %v896 = vtanh.pop %v875
        %v897 = vmul.f32 %v895, %v778
        %899 = vrot.lane.b32.xlu0 %v896, 64
        %v900 = vpop.permute.xlu0 %899
        %v902 = vmul.f32 %v895, %v900
        %904 = vrot.lane.b32.xlu0 %v902, 32
        %v905 = vpop.permute.xlu0 %904
        %v907 = vadd.f32 %v897, %v905
        %v908 = vtanh.pop %v907
        %910 = vrot.lane.b32.xlu0 %v908, 64
        %v911 = vpop.permute.xlu0 %910
        %v913 = vmul.f32 %v895, %v911
        %v914 = vsel %vm396, %v847, 0
        %916 = vmatpush.msra.mxu0 0.0
        %917 = vmatpush.msra.mxu0 0.0
        %918 = vmatpush.msra.mxu0 0.0
        %919 = vmatpush.msra.mxu0 0.0
        %920 = vmatpush.msra.mxu0 0.0
        %921 = vmatpush.msra.mxu0 0.0
        %922 = vmatpush.msra.mxu0 0.0
        %923 = vmatpush.msra.mxu0 0.0
        %924 = vmatpush.msra.mxu0 0.0
        %925 = vmatpush.msra.mxu0 0.0
        %926 = vmatpush.msra.mxu0 0.0
        %927 = vmatpush.msra.mxu0 0.0
        %928 = vmatpush.msra.mxu0 %v386
        %929 = vmatpush.msra.mxu0 %v385
        %930 = vmatpush.msra.mxu0 %v384
        %931 = vmatpush.msra.mxu0 %v383
        %932 = vmatmul.f32.gmra.mxu0 %v914
        %v933 = vpop.f32.mrf.mxu0
        %v934 = vadd.f32 0.0, %v933
        %935 = vdwg.mxu0
        %v936 = vadd.f32 %v372, %v934
        %v937 = vxor.u32 %v936, 2147483648
        %v938 = vmul.f32 %v937, 1.442695
        %v939 = vpow.pop %v938
        %v940 = vadd.f32 %v939, 1.0
        %v941 = vrcp.pop %v940
        %v942 = vmul.f32 %v940, %v941
        %v943 = vsub.f32 1.0, %v942
        %v944 = vmul.f32 %v941, %v943
        %v945 = vadd.f32 %v941, %v944
        %vm946 = vweird.f32 %v940
        %vm947 = vweird.f32 %v941
        %vm948 = vmor %vm946, %vm947
        %v949 = vsel %vm948, %v941, %v945
        %v950 = vand.u32 2147483647, %v940
        %vm951 = vcmp.eq.f32.partialorder %v950, 8.507059e+37
        %v952 = vand.u32 %v940, 2147483648
        %v953 = vor.u32 1.1754944e-38, %v952
        %v954 = vsel %vm951, %v953, %v949
        %v955 = vmul.f32 1.0, %v954
        %v956 = vtanh.pop %v936
        %v957 = vmul.f32 %v955, %v838
        %959 = vrot.lane.b32.xlu0 %v956, 64
        %v960 = vpop.permute.xlu0 %959
        %v962 = vmul.f32 %v955, %v960
        %964 = vrot.lane.b32.xlu0 %v962, 32
        %v965 = vpop.permute.xlu0 %964
        %v967 = vadd.f32 %v957, %v965
        %v968 = vtanh.pop %v967
        %970 = vrot.lane.b32.xlu0 %v968, 64
        %v971 = vpop.permute.xlu0 %970
        %v973 = vmul.f32 %v955, %v971
        %975 = vrot.lane.b32.xlu0 %v973, 32
        %v976 = vpop.permute.xlu0 %975
        %979 = vrot.lane.b32.xlu0 %v913, 64
        %v980 = vpop.permute.xlu0 %979
        %v982 = vsel %vm396, %v976, %v980
        %v984 = vsel %vm466, %v982, 0
        %986 = vmatpush.msra.mxu0 0.0
        %987 = vmatpush.msra.mxu0 0.0
        %988 = vmatpush.msra.mxu0 0.0
        %989 = vmatpush.msra.mxu0 0.0
        %990 = vmatpush.msra.mxu0 0.0
        %991 = vmatpush.msra.mxu0 0.0
        %992 = vmatpush.msra.mxu0 0.0
        %993 = vmatpush.msra.mxu0 0.0
        %994 = vmatpush.msra.mxu0 %v394
        %995 = vmatpush.msra.mxu0 %v393
        %996 = vmatpush.msra.mxu0 %v392
        %997 = vmatpush.msra.mxu0 %v391
        %998 = vmatpush.msra.mxu0 %v390
        %999 = vmatpush.msra.mxu0 %v389
        %1000 = vmatpush.msra.mxu0 %v388
        %1001 = vmatpush.msra.mxu0 %v387
        %1002 = vmatmul.f32.gmra.mxu0 %v984
        %v1003 = vpop.f32.mrf.mxu0
        %v1004 = vadd.f32 %v464, %v1003
        %1005 = vdwg.mxu0
        %v1006 = vxor.u32 %v1004, 2147483648
        %v1007 = vmul.f32 %v1006, 1.442695
        %v1008 = vpow.pop %v1007
        %v1009 = vadd.f32 %v1008, 1.0
        %v1010 = vrcp.pop %v1009
        %v1011 = vmul.f32 %v1009, %v1010
        %v1012 = vsub.f32 1.0, %v1011
        %v1013 = vmul.f32 %v1010, %v1012
        %v1014 = vadd.f32 %v1010, %v1013
        %vm1015 = vweird.f32 %v1009
        %vm1016 = vweird.f32 %v1010
        %vm1017 = vmor %vm1015, %vm1016
        %v1018 = vsel %vm1017, %v1010, %v1014
        %v1019 = vand.u32 2147483647, %v1009
        %vm1020 = vcmp.eq.f32.partialorder %v1019, 8.507059e+37
        %v1021 = vand.u32 %v1009, 2147483648
        %v1022 = vor.u32 1.1754944e-38, %v1021
        %v1023 = vsel %vm1020, %v1022, %v1018
        %v1024 = vmul.f32 1.0, %v1023
        %v1025 = vtanh.pop %v1004
        %v1026 = vmul.f32 %v1024, %v907
        %1028 = vrot.lane.b32.xlu0 %v1025, 64
        %v1029 = vpop.permute.xlu0 %1028
        %v1031 = vmul.f32 %v1024, %v1029
        %1033 = vrot.lane.b32.xlu0 %v1031, 32
        %v1034 = vpop.permute.xlu0 %1033
        %v1036 = vadd.f32 %v1026, %v1034
        %v1037 = vtanh.pop %v1036
        %1039 = vrot.lane.b32.xlu0 %v1037, 64
        %v1040 = vpop.permute.xlu0 %1039
        %v1042 = vmul.f32 %v1024, %v1040
        %v1043 = vsel %vm396, %v976, 0
        %1045 = vmatpush.msra.mxu0 0.0
        %1046 = vmatpush.msra.mxu0 0.0
        %1047 = vmatpush.msra.mxu0 0.0
        %1048 = vmatpush.msra.mxu0 0.0
        %1049 = vmatpush.msra.mxu0 0.0
        %1050 = vmatpush.msra.mxu0 0.0
        %1051 = vmatpush.msra.mxu0 0.0
        %1052 = vmatpush.msra.mxu0 0.0
        %1053 = vmatpush.msra.mxu0 0.0
        %1054 = vmatpush.msra.mxu0 0.0
        %1055 = vmatpush.msra.mxu0 0.0
        %1056 = vmatpush.msra.mxu0 0.0
        %1057 = vmatpush.msra.mxu0 %v386
        %1058 = vmatpush.msra.mxu0 %v385
        %1059 = vmatpush.msra.mxu0 %v384
        %1060 = vmatpush.msra.mxu0 %v383
        %1061 = vmatmul.f32.gmra.mxu0 %v1043
        %v1062 = vpop.f32.mrf.mxu0
        %v1063 = vadd.f32 0.0, %v1062
        %1064 = vdwg.mxu0
        %v1065 = vadd.f32 %v375, %v1063
        %v1066 = vxor.u32 %v1065, 2147483648
        %v1067 = vmul.f32 %v1066, 1.442695
        %v1068 = vpow.pop %v1067
        %v1069 = vadd.f32 %v1068, 1.0
        %v1070 = vrcp.pop %v1069
        %v1071 = vmul.f32 %v1069, %v1070
        %v1072 = vsub.f32 1.0, %v1071
        %v1073 = vmul.f32 %v1070, %v1072
        %v1074 = vadd.f32 %v1070, %v1073
        %vm1075 = vweird.f32 %v1069
        %vm1076 = vweird.f32 %v1070
        %vm1077 = vmor %vm1075, %vm1076
        %v1078 = vsel %vm1077, %v1070, %v1074
        %v1079 = vand.u32 2147483647, %v1069
        %vm1080 = vcmp.eq.f32.partialorder %v1079, 8.507059e+37
        %v1081 = vand.u32 %v1069, 2147483648
        %v1082 = vor.u32 1.1754944e-38, %v1081
        %v1083 = vsel %vm1080, %v1082, %v1078
        %v1084 = vmul.f32 1.0, %v1083
        %v1085 = vtanh.pop %v1065
        %v1086 = vmul.f32 %v1084, %v967
        %1088 = vrot.lane.b32.xlu0 %v1085, 64
        %v1089 = vpop.permute.xlu0 %1088
        %v1091 = vmul.f32 %v1084, %v1089
        %1093 = vrot.lane.b32.xlu0 %v1091, 32
        %v1094 = vpop.permute.xlu0 %1093
        %v1096 = vadd.f32 %v1086, %v1094
        %v1097 = vtanh.pop %v1096
        %1099 = vrot.lane.b32.xlu0 %v1097, 64
        %v1100 = vpop.permute.xlu0 %1099
        %v1102 = vmul.f32 %v1084, %v1100
        %1104 = vrot.lane.b32.xlu0 %v1102, 32
        %v1105 = vpop.permute.xlu0 %1104
        %1108 = vrot.lane.b32.xlu0 %v1042, 64
        %v1109 = vpop.permute.xlu0 %1108
        %v1111 = vsel %vm396, %v1105, %v1109
        %v1113 = vsel %vm466, %v1111, 0
        %1115 = vmatpush.msra.mxu0 0.0
        %1116 = vmatpush.msra.mxu0 0.0
        %1117 = vmatpush.msra.mxu0 0.0
        %1118 = vmatpush.msra.mxu0 0.0
        %1119 = vmatpush.msra.mxu0 0.0
        %1120 = vmatpush.msra.mxu0 0.0
        %1121 = vmatpush.msra.mxu0 0.0
        %1122 = vmatpush.msra.mxu0 0.0
        %1123 = vmatpush.msra.mxu0 %v394
        %1124 = vmatpush.msra.mxu0 %v393
        %1125 = vmatpush.msra.mxu0 %v392
        %1126 = vmatpush.msra.mxu0 %v391
        %1127 = vmatpush.msra.mxu0 %v390
        %1128 = vmatpush.msra.mxu0 %v389
        %1129 = vmatpush.msra.mxu0 %v388
        %1130 = vmatpush.msra.mxu0 %v387
        %1131 = vmatmul.f32.gmra.mxu0 %v1113
        %v1132 = vpop.f32.mrf.mxu0
        %v1133 = vadd.f32 %v464, %v1132
        %1134 = vdwg.mxu0
        %v1135 = vxor.u32 %v1133, 2147483648
        %v1136 = vmul.f32 %v1135, 1.442695
        %v1137 = vpow.pop %v1136
        %v1138 = vadd.f32 %v1137, 1.0
        %v1139 = vrcp.pop %v1138
        %v1140 = vmul.f32 %v1138, %v1139
        %v1141 = vsub.f32 1.0, %v1140
        %v1142 = vmul.f32 %v1139, %v1141
        %v1143 = vadd.f32 %v1139, %v1142
        %vm1144 = vweird.f32 %v1138
        %vm1145 = vweird.f32 %v1139
        %vm1146 = vmor %vm1144, %vm1145
        %v1147 = vsel %vm1146, %v1139, %v1143
        %v1148 = vand.u32 2147483647, %v1138
        %vm1149 = vcmp.eq.f32.partialorder %v1148, 8.507059e+37
        %v1150 = vand.u32 %v1138, 2147483648
        %v1151 = vor.u32 1.1754944e-38, %v1150
        %v1152 = vsel %vm1149, %v1151, %v1147
        %v1153 = vmul.f32 1.0, %v1152
        %v1154 = vtanh.pop %v1133
        %v1155 = vmul.f32 %v1153, %v1036
        %1157 = vrot.lane.b32.xlu0 %v1154, 64
        %v1158 = vpop.permute.xlu0 %1157
        %v1160 = vmul.f32 %v1153, %v1158
        %1162 = vrot.lane.b32.xlu0 %v1160, 32
        %v1163 = vpop.permute.xlu0 %1162
        %v1165 = vadd.f32 %v1155, %v1163
        %v1166 = vtanh.pop %v1165
        %1168 = vrot.lane.b32.xlu0 %v1166, 64
        %v1169 = vpop.permute.xlu0 %1168
        %v1171 = vmul.f32 %v1153, %v1169
        %v1172 = vsel %vm396, %v1105, 0
        %1174 = vmatpush.msra.mxu0 0.0
        %1175 = vmatpush.msra.mxu0 0.0
        %1176 = vmatpush.msra.mxu0 0.0
        %1177 = vmatpush.msra.mxu0 0.0
        %1178 = vmatpush.msra.mxu0 0.0
        %1179 = vmatpush.msra.mxu0 0.0
        %1180 = vmatpush.msra.mxu0 0.0
        %1181 = vmatpush.msra.mxu0 0.0
        %1182 = vmatpush.msra.mxu0 0.0
        %1183 = vmatpush.msra.mxu0 0.0
        %1184 = vmatpush.msra.mxu0 0.0
        %1185 = vmatpush.msra.mxu0 0.0
        %1186 = vmatpush.msra.mxu0 %v386
        %1187 = vmatpush.msra.mxu0 %v385
        %1188 = vmatpush.msra.mxu0 %v384
        %1189 = vmatpush.msra.mxu0 %v383
        %1190 = vmatmul.f32.gmra.mxu0 %v1172
        %v1191 = vpop.f32.mrf.mxu0
        %v1192 = vadd.f32 0.0, %v1191
        %1193 = vdwg.mxu0
        %v1194 = vadd.f32 %v378, %v1192
        %v1195 = vxor.u32 %v1194, 2147483648
        %v1196 = vmul.f32 %v1195, 1.442695
        %v1197 = vpow.pop %v1196
        %v1198 = vadd.f32 %v1197, 1.0
        %v1199 = vrcp.pop %v1198
        %v1200 = vmul.f32 %v1198, %v1199
        %v1201 = vsub.f32 1.0, %v1200
        %v1202 = vmul.f32 %v1199, %v1201
        %v1203 = vadd.f32 %v1199, %v1202
        %vm1204 = vweird.f32 %v1198
        %vm1205 = vweird.f32 %v1199
        %vm1206 = vmor %vm1204, %vm1205
        %v1207 = vsel %vm1206, %v1199, %v1203
        %v1208 = vand.u32 2147483647, %v1198
        %vm1209 = vcmp.eq.f32.partialorder %v1208, 8.507059e+37
        %v1210 = vand.u32 %v1198, 2147483648
        %v1211 = vor.u32 1.1754944e-38, %v1210
        %v1212 = vsel %vm1209, %v1211, %v1207
        %v1213 = vmul.f32 1.0, %v1212
        %v1214 = vtanh.pop %v1194
        %v1215 = vmul.f32 %v1213, %v1096
        %1217 = vrot.lane.b32.xlu0 %v1214, 64
        %v1218 = vpop.permute.xlu0 %1217
        %v1220 = vmul.f32 %v1213, %v1218
        %1222 = vrot.lane.b32.xlu0 %v1220, 32
        %v1223 = vpop.permute.xlu0 %1222
        %v1225 = vadd.f32 %v1215, %v1223
        %v1226 = vtanh.pop %v1225
        %1228 = vrot.lane.b32.xlu0 %v1226, 64
        %v1229 = vpop.permute.xlu0 %1228
        %v1231 = vmul.f32 %v1213, %v1229
        %1233 = vrot.lane.b32.xlu0 %v1231, 32
        %v1234 = vpop.permute.xlu0 %1233
        %1237 = vrot.lane.b32.xlu0 %v1171, 64
        %v1238 = vpop.permute.xlu0 %1237
        %v1240 = vsel %vm396, %v1234, %v1238
        %v1242 = vsel %vm466, %v1240, 0
        %1244 = vmatpush.msra.mxu0 0.0
        %1245 = vmatpush.msra.mxu0 0.0
        %1246 = vmatpush.msra.mxu0 0.0
        %1247 = vmatpush.msra.mxu0 0.0
        %1248 = vmatpush.msra.mxu0 0.0
        %1249 = vmatpush.msra.mxu0 0.0
        %1250 = vmatpush.msra.mxu0 0.0
        %1251 = vmatpush.msra.mxu0 0.0
        %1252 = vmatpush.msra.mxu0 %v394
        %1253 = vmatpush.msra.mxu0 %v393
        %1254 = vmatpush.msra.mxu0 %v392
        %1255 = vmatpush.msra.mxu0 %v391
        %1256 = vmatpush.msra.mxu0 %v390
        %1257 = vmatpush.msra.mxu0 %v389
        %1258 = vmatpush.msra.mxu0 %v388
        %1259 = vmatpush.msra.mxu0 %v387
        %1260 = vmatmul.f32.gmra.mxu0 %v1242
        %v1261 = vpop.f32.mrf.mxu0
        %v1262 = vadd.f32 %v464, %v1261
        %1263 = vdwg.mxu0
        %v1264 = vxor.u32 %v1262, 2147483648
        %v1265 = vmul.f32 %v1264, 1.442695
        %v1266 = vpow.pop %v1265
        %v1267 = vadd.f32 %v1266, 1.0
        %v1268 = vrcp.pop %v1267
        %v1269 = vmul.f32 %v1267, %v1268
        %v1270 = vsub.f32 1.0, %v1269
        %v1271 = vmul.f32 %v1268, %v1270
        %v1272 = vadd.f32 %v1268, %v1271
        %vm1273 = vweird.f32 %v1267
        %vm1274 = vweird.f32 %v1268
        %vm1275 = vmor %vm1273, %vm1274
        %v1276 = vsel %vm1275, %v1268, %v1272
        %v1277 = vand.u32 2147483647, %v1267
        %vm1278 = vcmp.eq.f32.partialorder %v1277, 8.507059e+37
        %v1279 = vand.u32 %v1267, 2147483648
        %v1280 = vor.u32 1.1754944e-38, %v1279
        %v1281 = vsel %vm1278, %v1280, %v1276
        %v1282 = vmul.f32 1.0, %v1281
        %v1283 = vtanh.pop %v1262
        %v1284 = vmul.f32 %v1282, %v1165
        %1286 = vrot.lane.b32.xlu0 %v1283, 64
        %v1287 = vpop.permute.xlu0 %1286
        %v1289 = vmul.f32 %v1282, %v1287
        %1291 = vrot.lane.b32.xlu0 %v1289, 32
        %v1292 = vpop.permute.xlu0 %1291
        %v1294 = vadd.f32 %v1284, %v1292
        %v1295 = vtanh.pop %v1294
        %1297 = vrot.lane.b32.xlu0 %v1295, 64
        %v1298 = vpop.permute.xlu0 %1297
        %v1300 = vmul.f32 %v1282, %v1298
        %v1301 = vsel %vm396, %v1234, 0
        %1303 = vmatpush.msra.mxu0 0.0
        %1304 = vmatpush.msra.mxu0 0.0
        %1305 = vmatpush.msra.mxu0 0.0
        %1306 = vmatpush.msra.mxu0 0.0
        %1307 = vmatpush.msra.mxu0 0.0
        %1308 = vmatpush.msra.mxu0 0.0
        %1309 = vmatpush.msra.mxu0 0.0
        %1310 = vmatpush.msra.mxu0 0.0
        %1311 = vmatpush.msra.mxu0 0.0
        %1312 = vmatpush.msra.mxu0 0.0
        %1313 = vmatpush.msra.mxu0 0.0
        %1314 = vmatpush.msra.mxu0 0.0
        %1315 = vmatpush.msra.mxu0 %v386
        %1316 = vmatpush.msra.mxu0 %v385
        %1317 = vmatpush.msra.mxu0 %v384
        %1318 = vmatpush.msra.mxu0 %v383
        %1319 = vmatmul.f32.gmra.mxu0 %v1301
        %v1320 = vpop.f32.mrf.mxu0
        %v1321 = vadd.f32 0.0, %v1320
        %1322 = vdwg.mxu0
        %v1323 = vadd.f32 %v381, %v1321
        %v1324 = vxor.u32 %v1323, 2147483648
        %v1325 = vmul.f32 %v1324, 1.442695
        %v1326 = vpow.pop %v1325
        %v1327 = vadd.f32 %v1326, 1.0
        %v1328 = vrcp.pop %v1327
        %v1329 = vmul.f32 %v1327, %v1328
        %v1330 = vsub.f32 1.0, %v1329
        %v1331 = vmul.f32 %v1328, %v1330
        %v1332 = vadd.f32 %v1328, %v1331
        %vm1333 = vweird.f32 %v1327
        %vm1334 = vweird.f32 %v1328
        %vm1335 = vmor %vm1333, %vm1334
        %v1336 = vsel %vm1335, %v1328, %v1332
        %v1337 = vand.u32 2147483647, %v1327
        %vm1338 = vcmp.eq.f32.partialorder %v1337, 8.507059e+37
        %v1339 = vand.u32 %v1327, 2147483648
        %v1340 = vor.u32 1.1754944e-38, %v1339
        %v1341 = vsel %vm1338, %v1340, %v1336
        %v1342 = vmul.f32 1.0, %v1341
        %v1343 = vtanh.pop %v1323
        %v1344 = vmul.f32 %v1342, %v1225
        %1346 = vrot.lane.b32.xlu0 %v1343, 64
        %v1347 = vpop.permute.xlu0 %1346
        %v1349 = vmul.f32 %v1342, %v1347
        %1351 = vrot.lane.b32.xlu0 %v1349, 32
        %v1352 = vpop.permute.xlu0 %1351
        %v1354 = vadd.f32 %v1344, %v1352
        %v1355 = vtanh.pop %v1354
        %1357 = vrot.lane.b32.xlu0 %v1355, 64
        %v1358 = vpop.permute.xlu0 %1357
        %v1360 = vmul.f32 %v1342, %v1358
        %1362 = vrot.lane.b32.xlu0 %v1360, 32
        %v1363 = vpop.permute.xlu0 %1362
        %1366 = vrot.lane.b32.xlu0 %v1300, 64
        %v1367 = vpop.permute.xlu0 %1366
        %v1369 = vsel %vm396, %v1363, %v1367
        %v1371 = vsel %vm466, %v1369, 0
        %1373 = vmatpush.msra.mxu0 0.0
        %1374 = vmatpush.msra.mxu0 0.0
        %1375 = vmatpush.msra.mxu0 0.0
        %1376 = vmatpush.msra.mxu0 0.0
        %1377 = vmatpush.msra.mxu0 0.0
        %1378 = vmatpush.msra.mxu0 0.0
        %1379 = vmatpush.msra.mxu0 0.0
        %1380 = vmatpush.msra.mxu0 0.0
        %1381 = vmatpush.msra.mxu0 %v394
        %1382 = vmatpush.msra.mxu0 %v393
        %1383 = vmatpush.msra.mxu0 %v392
        %1384 = vmatpush.msra.mxu0 %v391
        %1385 = vmatpush.msra.mxu0 %v390
        %1386 = vmatpush.msra.mxu0 %v389
        %1387 = vmatpush.msra.mxu0 %v388
        %1388 = vmatpush.msra.mxu0 %v387
        %1389 = vmatmul.f32.gmra.mxu0 %v1371
        %v1390 = vpop.f32.mrf.mxu0
        %v1391 = vadd.f32 %v464, %v1390
        %1392 = vdwg.mxu0
        %v1393 = vxor.u32 %v1391, 2147483648
        %v1394 = vmul.f32 %v1393, 1.442695
        %v1395 = vpow.pop %v1394
        %v1396 = vadd.f32 %v1395, 1.0
        %v1397 = vrcp.pop %v1396
        %v1398 = vmul.f32 %v1396, %v1397
        %v1399 = vsub.f32 1.0, %v1398
        %v1400 = vmul.f32 %v1397, %v1399
        %v1401 = vadd.f32 %v1397, %v1400
        %vm1402 = vweird.f32 %v1396
        %vm1403 = vweird.f32 %v1397
        %vm1404 = vmor %vm1402, %vm1403
        %v1405 = vsel %vm1404, %v1397, %v1401
        %v1406 = vand.u32 2147483647, %v1396
        %vm1407 = vcmp.eq.f32.partialorder %v1406, 8.507059e+37
        %v1408 = vand.u32 %v1396, 2147483648
        %v1409 = vor.u32 1.1754944e-38, %v1408
        %v1410 = vsel %vm1407, %v1409, %v1405
        %v1411 = vmul.f32 1.0, %v1410
        %v1412 = vtanh.pop %v1391
        %v1413 = vmul.f32 %v1411, %v1294
        %1415 = vrot.lane.b32.xlu0 %v1412, 64
        %v1416 = vpop.permute.xlu0 %1415
        %v1418 = vmul.f32 %v1411, %v1416
        %1420 = vrot.lane.b32.xlu0 %v1418, 32
        %v1421 = vpop.permute.xlu0 %1420
        %v1423 = vadd.f32 %v1413, %v1421
        %v1424 = vtanh.pop %v1423
        %1426 = vrot.lane.b32.xlu0 %v1424, 64
        %v1427 = vpop.permute.xlu0 %1426
        %v1429 = vmul.f32 %v1411, %v1427
        %v1430 = vld [vmem:[%s6] sm:$0xff]
        %v1431 = vld [vmem:[%s6 + $0x8] sm:$0xff]
        %v1432 = vld [vmem:[%s6 + $0x10] sm:$0xff]
        %v1433 = vld [vmem:[%s6 + $0x18] sm:$0xff]
        %v1434 = vld [vmem:[%s7] sm:$0x1]
        %v1436 = vperm.slane %v1434, 0
        %1439 = vrot.lane.b32.xlu0 %v1429, 32
        %v1440 = vpop.permute.xlu0 %1439
        %v1441 = vsel %vm396, %v1440, 0
        %1443 = vmatpush.msra.mxu0 0.0
        %1444 = vmatpush.msra.mxu0 0.0
        %1445 = vmatpush.msra.mxu0 0.0
        %1446 = vmatpush.msra.mxu0 0.0
        %1447 = vmatpush.msra.mxu0 0.0
        %1448 = vmatpush.msra.mxu0 0.0
        %1449 = vmatpush.msra.mxu0 0.0
        %1450 = vmatpush.msra.mxu0 0.0
        %1451 = vmatpush.msra.mxu0 0.0
        %1452 = vmatpush.msra.mxu0 0.0
        %1453 = vmatpush.msra.mxu0 0.0
        %1454 = vmatpush.msra.mxu0 0.0
        %1455 = vmatpush.msra.mxu0 %v1433
        %1456 = vmatpush.msra.mxu0 %v1432
        %1457 = vmatpush.msra.mxu0 %v1431
        %1458 = vmatpush.msra.mxu0 %v1430
        %1459 = vmatmul.f32.gmra.mxu0 %v1441
        %v1460 = vpop.f32.mrf.mxu0
        %v1461 = vadd.f32 %v1436, %v1460
        %1462 = vdwg.mxu0
        %1463 = vst [vmem:[%s298] sm:$0xff] %v1461
        %s1464 = sand.u32 %s203, 1
        %s1465 = scalar_lea.sflag [#allocation3], %s1464
        %s1466 = sand.u32 %s203, 1
        %s1467 = smul.addr %s1466, 8
        %s1468 = scalar_lea.vmem [#allocation2], %s1467
        // Predicated region
        $region53: #{tpu_custom_call.1} parent=51 // pred_check
          %p1469 = pneg %p213
        $region54: #{tpu_custom_call.1} parent=51 // pred_check_branch
          %1471 = sbr.rel (%p1469) target = $region56
        $region55: #{tpu_custom_call.1} parent=51 // pred_region
          %1473 = vsyncadd %s1465, 0
          %s1474 = smul.addr %s22, 8
          %s1475 = scalar_lea.hbm %s8, %s1474
          %s1477 = sshll.u32 %s1468, 4
          %s1478 = int_to_ptr.vmem [resolvable:$true] %s1477
          %s1479 = sshll.u32 %s1475, 4
          %s1480 = int_to_ptr.hbm [resolvable:$true] %s1479
          %1482 = dma.vmem_to_hbm [thread:$0]  %s1478, 128, %s1480, %s1465
        $region56: #{tpu_custom_call.1} parent=51 // pred_fallthru
          _
      $region52: #{tpu_custom_call.1} parent=5 // pred_fallthru
        _
      %p1483 = scmp.le.s32.totalorder 2, %s17
      // Predicated region
      $region57: #{tpu_custom_call.1} parent=5 // pred_check
        %p1484 = pneg %p1483
      $region58: #{tpu_custom_call.1} parent=5 // pred_check_branch
        %1486 = sbr.rel (%p1484) target = $region60
      $region59: #{tpu_custom_call.1} parent=5 // pred_region
        %s1487 = ssub.s32 %s17, 2
        // Predicated region
        $region61: #{tpu_custom_call.1} parent=59 // pred_check
          %p1488 = pneg %p219
        $region62: #{tpu_custom_call.1} parent=59 // pred_check_branch
          %1490 = sbr.rel (%p1488) target = $region64
        $region63: #{tpu_custom_call.1} parent=59 // pred_region
          %s1491 = sand.u32 %s204, 1
          %s1492 = scalar_lea.sflag [#allocation3], %s1491
          %s1493 = sand.u32 %s204, 1
          %s1494 = smul.addr %s1493, 8
          %s1495 = scalar_lea.vmem [#allocation2], %s1494
          %1497 = dma.done %s1492, 128
        $region64: #{tpu_custom_call.1} parent=59 // pred_fallthru
          _
      $region60: #{tpu_custom_call.1} parent=5 // pred_fallthru
        _
    $region6: #{tpu_custom_call.1} parent=1 // loop_footer
      %s21 = sadd.s32 1, %s17
    $region7: #{tpu_custom_call.1} parent=1 // loop_footer_branch
      %16 = sbr.rel target = $region3
    $region8: #{tpu_custom_call.1} parent=1 // loop_exit
      _
    %1498 = vsyncpa [#allocation3], 1
    %s1499 = scalar_lea.sflag [#allocation3], 1
    %1500 = vsyncpa %s1499, 1

</llo_original>
